<compile_context>
chip_gen: v5e
topology: v5e:2x2
jax: 0.10.0
libtpu: 0.0.40
codegen_flags: <defaults>
</compile_context>

<pallas_src>
import functools

import jax
import jax.numpy as jnp
import numpy as np
from jax.experimental import pallas as pl
from jax.experimental.pallas import tpu as pltpu

VAR_EPS = 1e-4
BN_EPS = 1e-3

FUSED_ORDER = ["w_enc", "b_enc", "w_head", "b_head",
               "wct", "bct", "wd1", "bd1", "wout", "bout"]


def _vae_kernel(
    # ---- inputs ----
    x_ref, eps_z_ref,
    w_enc_ref, b_enc_ref, w_head_ref, b_head_ref,
    wct_ref, bct_ref, wd1_ref, bd1_ref, wout_ref, bout_ref,
    # ---- outputs ----
    px_scale_ref, px_rate_ref, px_dropout_ref, px_ref, slab_ref,
):
    L = eps_z_ref.shape[-1]
    C = bct_ref.shape[-1]
    G = x_ref.shape[-1]
    tb = x_ref.shape[0]
    slab_w = slab_ref.shape[-1]
    mm_dtype = w_enc_ref.dtype          # f32 or bf16, chosen in the wrapper

    def mm(a, w_ref):
        # MXU matmul; always accumulate in f32.
        return jnp.dot(a.astype(mm_dtype), w_ref[...],
                       preferred_element_type=jnp.float32)

    x = x_ref[...]
    sum_x = jnp.sum(x, axis=-1, keepdims=True)   # observed library (linear space)
    library = jnp.log(sum_x)                     # returned log-library
    xl = jnp.log1p(x)                            # log_variational

    # ---- fused z/library encoder first layer (BN folded into W/b) ----
    # one (tb,G)x(G,2H) MXU pass instead of two (tb,G)x(G,H) passes
    henc = jnp.maximum(mm(xl, w_enc_ref) + b_enc_ref[...], 0.0)

    # ---- fused block-diagonal mean|logvar heads of both encoders ----
    # head[:, :2L] uses hz = henc[:, :H]; head[:, 2L:] uses hl = henc[:, H:]
    head = mm(henc, w_head_ref) + b_head_ref[...]
    qz_m = head[:, 0:L]
    qz_v = jnp.exp(head[:, L:2 * L]) + VAR_EPS
    # reparameterized Normal sample; z_transformation is identity ('normal')
    z = qz_m + jnp.sqrt(qz_v) * eps_z_ref[...]
    ql_m = head[:, 2 * L:2 * L + 1]
    ql_v = jnp.exp(head[:, 2 * L + 1:2 * L + 2]) + VAR_EPS
    # library_encoded is unused when use_observed_lib_size=True

    # ---- cell-type head ----
    ct = jnp.maximum(mm(qz_m, wct_ref) + bct_ref[...], 0.0)

    # ---- decoder (BN folded; fused scale-logits|dropout head) ----
    px = jnp.maximum(mm(z, wd1_ref) + bd1_ref[...], 0.0)
    dec = mm(px, wout_ref) + bout_ref[...]
    logits = dec[:, :G]
    px_dropout = dec[:, G:]
    m = jnp.max(logits, axis=-1, keepdims=True)
    e = jnp.exp(logits - m)
    denom = jnp.sum(e, axis=-1, keepdims=True)
    inv = pl.reciprocal(denom, approx=True)      # EUP slot
    inv = inv * (2.0 - denom * inv)              # one Newton step -> ~f32 exact
    px_scale = e * inv                           # Softmax(dim=-1)
    px_rate = sum_x * px_scale                   # == exp(library) * px_scale

    # ---- writes ----
    px_scale_ref[...] = px_scale.astype(px_scale_ref.dtype)
    px_rate_ref[...] = px_rate.astype(px_rate_ref.dtype)
    px_dropout_ref[...] = px_dropout.astype(px_dropout_ref.dtype)
    px_ref[...] = px.astype(px_ref.dtype)

    # lane-dense packed slab of all the narrow per-cell outputs (one unmasked store)
    pieces = [qz_m, qz_v, z, ct, ql_m, ql_v, library]
    used = 3 * L + C + 3
    if slab_w > used:
        pieces.append(jnp.zeros((tb, slab_w - used), jnp.float32))
    slab_ref[...] = jnp.concatenate(pieces, axis=-1)


def _fuse_params(p, matmul_dtype):
    """Fold eval-mode BatchNorm into the Linears and fuse heads (done once, host side).

    BN(eval) is affine: h*g + t (g = gamma/sqrt(var+eps), t = beta - mean*g), so
    relu(BN(x@W + b)) == relu(x@(W*g) + (b*g + t)).
    """
    H = p["wz1"].shape[1]
    f32 = jnp.float32

    wz1 = p["wz1"] * p["gz1"]
    bz1 = p["bz1"] * p["gz1"] + p["betaz1"]
    wl1 = p["wl1"] * p["gl1"]
    bl1 = p["bl1"] * p["gl1"] + p["betal1"]
    wd1 = p["wd1"] * p["gd1"]
    bd1 = p["bd1"] * p["gd1"] + p["betad1"]

    # single encoder first-layer matmul: N = 2H exactly fills a 256-wide MXU
    w_enc = jnp.concatenate([wz1, wl1], axis=1)          # (G, 2H)
    b_enc = jnp.concatenate([bz1, bl1], axis=1)          # (1, 2H)

    # block-diagonal fusion of the narrow heads applied to henc = [hz | hl]
    wzh = jnp.concatenate([p["wzm"], p["wzv"]], axis=1)  # (H, 2L)
    wlh = jnp.concatenate([p["wlm"], p["wlv"]], axis=1)  # (H, 2)
    w_head = jnp.concatenate(
        [jnp.concatenate([wzh, jnp.zeros((H, 2), f32)], axis=1),
         jnp.concatenate([jnp.zeros((H, wzh.shape[1]), f32), wlh], axis=1)],
        axis=0)                                          # (2H, 2L+2)
    b_head = jnp.concatenate([p["bzm"], p["bzv"], p["blm"], p["blv"]], axis=1)

    # fused decoder output head: scale-logits | dropout-logits
    w_out = jnp.concatenate([p["wscale"], p["wdrop"]], axis=1)   # (H, 2G)
    b_out = jnp.concatenate([p["bscale"], p["bdrop"]], axis=1)   # (1, 2G)

    md = matmul_dtype
    return {
        "w_enc": w_enc.astype(md), "b_enc": b_enc,
        "w_head": w_head.astype(md), "b_head": b_head,
        "wct": p["wct"].astype(md), "bct": p["bct"],
        "wd1": wd1.astype(md), "bd1": bd1,
        "wout": w_out.astype(md), "bout": b_out,
    }


@functools.lru_cache(maxsize=1)
def _vmem_limit_bytes():
    """Generation-aware VMEM limit: physical capacity minus 16 MiB headroom
    (v7x: ~48 MiB, v5e/v6e: ~112 MiB)."""
    try:
        cap = int(pltpu.get_tpu_info().vmem_capacity_bytes)
    except Exception:
        cap = 64 * 1024 * 1024
    return max(32 * 1024 * 1024, cap - 16 * 1024 * 1024)


@functools.lru_cache(maxsize=1)
def _buffered_weights_supported():
    """Probe pl.Buffered(1) (single-buffered grid-invariant weights) on a tiny
    dedicated kernel once and cache the result. This avoids compiling/running
    the real kernel twice and never swallows real kernel errors."""
    if not hasattr(pl, "Buffered"):
        return False
    try:
        def k(w_ref, o_ref):
            o_ref[...] = w_ref[...] * 2.0

        probe = pl.pallas_call(
            k,
            grid=(2,),
            in_specs=[pl.BlockSpec((8, 128), lambda i: (0, 0),
                                   pipeline_mode=pl.Buffered(1))],
            out_specs=pl.BlockSpec((8, 128), lambda i: (0, 0)),
            out_shape=jax.ShapeDtypeStruct((8, 128), jnp.float32),
        )
        jax.block_until_ready(probe(jnp.ones((8, 128), jnp.float32)))
        return True
    except Exception:
        return False


def _default_tb(B, cap=256):
    """Largest multiple-of-8 batch tile <= cap dividing B, preferring >= 2 grid
    steps so both v7x TensorCores get work (dimension_semantics='parallel')."""
    cands = [t for t in range(8, min(B, cap) + 1, 8) if B % t == 0]
    if not cands:
        return B
    two_step = [t for t in cands if B // t >= 2]
    return max(two_step) if two_step else max(cands)


def _build_call(B, G, H, L, slab_w, tb, weight_args, use_buffered, out_dtype):
    grid = (B // tb,)
    f32 = jnp.float32

    def batch_spec(d):
        return pl.BlockSpec((tb, d), lambda i: (i, 0))

    def weight_spec(shape):
        if not use_buffered:
            return pl.BlockSpec(shape, lambda i: (0, 0))
        # grid-invariant weights: single-buffer to halve their VMEM footprint
        return pl.BlockSpec(shape, lambda i: (0, 0), pipeline_mode=pl.Buffered(1))

    in_specs = [batch_spec(G), batch_spec(L)]                  # x, eps_z
    in_specs += [weight_spec(tuple(w.shape)) for w in weight_args]

    out_shape = (
        jax.ShapeDtypeStruct((B, G), out_dtype),   # px_scale
        jax.ShapeDtypeStruct((B, G), out_dtype),   # px_rate
        jax.ShapeDtypeStruct((B, G), out_dtype),   # px_dropout
        jax.ShapeDtypeStruct((B, H), f32),         # px (decoder hidden)
        jax.ShapeDtypeStruct((B, slab_w), f32),    # packed narrow outputs
    )
    out_specs = (batch_spec(G), batch_spec(G), batch_spec(G),
                 batch_spec(H), batch_spec(slab_w))

    return pl.pallas_call(
        _vae_kernel,
        grid=grid,
        in_specs=in_specs,
        out_specs=out_specs,
        out_shape=out_shape,
        compiler_params=pltpu.CompilerParams(
            dimension_semantics=("parallel",),
            vmem_limit_bytes=_vmem_limit_bytes(),
        ),
    )


def vae_forward(x, eps_z, params, *, tb=None,
                matmul_dtype=jnp.float32, out_dtype=jnp.float32):
    B, G = x.shape
    H = params["wz1"].shape[1]
    L = params["wzm"].shape[1]
    C = params["wct"].shape[1]
    if tb is None:
        tb = _default_tb(B)
    assert B % tb == 0 and tb % 8 == 0, (B, tb)

    used = 3 * L + C + 3
    slab_w = ((used + 127) // 128) * 128

    fused = _fuse_params(params, matmul_dtype)
    weight_args = [fused[name] for name in FUSED_ORDER]

    call = _build_call(B, G, H, L, slab_w, tb, weight_args,
                       _buffered_weights_supported(), out_dtype)
    px_scale, px_rate, px_dropout, px, slab = call(x, eps_z, *weight_args)

    qz_m = slab[:, 0:L]
    qz_v = slab[:, L:2 * L]
    z = slab[:, 2 * L:3 * L]
    ct = slab[:, 3 * L:3 * L + C]
    ql_m = slab[:, 3 * L + C:3 * L + C + 1]
    ql_v = slab[:, 3 * L + C + 1:3 * L + C + 2]
    library = slab[:, 3 * L + C + 2:3 * L + C + 3]
    # dispersion == 'gene': px_r is grid-invariant -> hoisted out of the kernel
    px_r = jnp.exp(params["pxr"])

    return dict(px_scale=px_scale, px_rate=px_rate, px_dropout=px_dropout,
                qz_m=qz_m, qz_v=qz_v, z=z, ql_m=ql_m, ql_v=ql_v, library=library,
                px=px, ctpred=ct, px_r=px_r)


def vae_forward_ref(x, eps_z, p):
    """Pure-JAX reference with identical semantics (for correctness check)."""
    library = jnp.log(jnp.sum(x, axis=-1, keepdims=True))
    xl = jnp.log1p(x)

    def fc(h, w, b, g, beta):
        h = h @ w + b
        return jnp.maximum(h * g + beta, 0.0)

    hz = fc(xl, p["wz1"], p["bz1"], p["gz1"], p["betaz1"])
    qz_m = hz @ p["wzm"] + p["bzm"]
    qz_v = jnp.exp(hz @ p["wzv"] + p["bzv"]) + VAR_EPS
    z = qz_m + jnp.sqrt(qz_v) * eps_z
    hl = fc(xl, p["wl1"], p["bl1"], p["gl1"], p["betal1"])
    ql_m = hl @ p["wlm"] + p["blm"]
    ql_v = jnp.exp(hl @ p["wlv"] + p["blv"]) + VAR_EPS
    ct = jnp.maximum(qz_m @ p["wct"] + p["bct"], 0.0)
    px = fc(z, p["wd1"], p["bd1"], p["gd1"], p["betad1"])
    px_scale = jax.nn.softmax(px @ p["wscale"] + p["bscale"], axis=-1)
    px_dropout = px @ p["wdrop"] + p["bdrop"]
    px_rate = jnp.exp(library) * px_scale
    return dict(px_scale=px_scale, px_rate=px_rate, px_dropout=px_dropout,
                qz_m=qz_m, qz_v=qz_v, z=z, ql_m=ql_m, ql_v=ql_v, library=library,
                px=px, ctpred=ct, px_r=jnp.exp(p["pxr"]))


def make_params(key, G, H, L, C):
    def dense(k, fan_in, fan_out):
        k1, k2 = jax.random.split(k)
        lim = 1.0 / np.sqrt(fan_in)
        w = jax.random.uniform(k1, (fan_in, fan_out), jnp.float32, -lim, lim)
        b = jax.random.uniform(k2, (1, fan_out), jnp.float32, -lim, lim)
        return w, b

    def bn(dim):
        # gamma=1, beta=0, running_mean=0, running_var=1 folded (eval mode)
        g = jnp.full((1, dim), 1.0 / np.sqrt(1.0 + BN_EPS), jnp.float32)
        beta = jnp.zeros((1, dim), jnp.float32)
        return g, beta

    keys = jax.random.split(key, 12)
    p = {}
    p["wz1"], p["bz1"] = dense(keys[0], G, H)
    p["gz1"], p["betaz1"] = bn(H)
    p["wzm"], p["bzm"] = dense(keys[1], H, L)
    p["wzv"], p["bzv"] = dense(keys[2], H, L)
    p["wl1"], p["bl1"] = dense(keys[3], G, H)
    p["gl1"], p["betal1"] = bn(H)
    p["wlm"], p["blm"] = dense(keys[4], H, 1)
    p["wlv"], p["blv"] = dense(keys[5], H, 1)
    p["wct"], p["bct"] = dense(keys[6], L, C)
    p["wd1"], p["bd1"] = dense(keys[7], L, H)
    p["gd1"], p["betad1"] = bn(H)
    p["wscale"], p["bscale"] = dense(keys[8], H, G)
    p["wdrop"], p["bdrop"] = dense(keys[9], H, G)
    p["pxr"] = jax.random.normal(keys[10], (1, G), jnp.float32)
    return p


if __name__ == "__main__":
    B, G, H, L, C = 16, 256, 128, 16, 10   # batch, genes, hidden, latent, celltypes
    key = jax.random.PRNGKey(0)
    kx, keps, kp = jax.random.split(key, 3)

    x = jax.random.uniform(kx, (B, G), jnp.float32, minval=0.1, maxval=10.0)
    eps_z = jax.random.normal(keps, (B, L), jnp.float32)
    params = make_params(kp, G, H, L, C)

    ref = vae_forward_ref(x, eps_z, params)

    # ---- f32 matmul path (default): tight parity with the reference ----
    out = jax.block_until_ready(vae_forward(x, eps_z, params))
    tol = {"px_scale": (1e-3, 1e-6), "px_rate": (1e-3, 1e-4)}   # Newton-refined recip
    for name in out:
        rtol, atol = tol.get(name, (1e-4, 1e-4))
        np.testing.assert_allclose(np.asarray(out[name]), np.asarray(ref[name]),
                                   rtol=rtol, atol=atol, err_msg=name)

    # ---- bf16 matmul operands (f32 accumulation): MXU-native, looser parity ----
    out_bf16 = jax.block_until_ready(
        vae_forward(x, eps_z, params, matmul_dtype=jnp.bfloat16))
    for name in out_bf16:
        np.testing.assert_allclose(np.asarray(out_bf16[name], dtype=np.float32),
                                   np.asarray(ref[name]),
                                   rtol=1e-1, atol=1.5e-1, err_msg=name + " (bf16)")

    print("KERNEL_OK")
</pallas_src>

<mosaic_0001>
module attributes {stable_mosaic.version = 11 : i64} {
  func.func @k(%arg0: i32, %arg1: memref<8x128xf32, #tpu.memory_space<vmem>>, %arg2: memref<8x128xf32, #tpu.memory_space<vmem>>) attributes {dimension_semantics = [#tpu.dimension_semantics<arbitrary>], iteration_bounds = array<i64: 2>, scalar_prefetch = 0 : i64, scratch_operands = 0 : i64, tpu.core_type = #tpu.core_type<tc>, window_params = [{pipeline_mode = #tpu.pipeline_mode<synchronous>, transform_indices = @transform_0, window_bounds = array<i64: 8, 128>}, {pipeline_mode = #tpu.pipeline_mode<synchronous>, transform_indices = @transform_1, window_bounds = array<i64: 8, 128>}]} {
    %c0 = arith.constant 0 : index
    %c0_0 = arith.constant 0 : index
    %0 = vector.load %arg1[%c0, %c0_0] : memref<8x128xf32, #tpu.memory_space<vmem>>, vector<8x128xf32>
    %cst = arith.constant 2.000000e+00 : f32
    %1 = vector.broadcast %cst : f32 to vector<8x128xf32>
    %2 = arith.mulf %0, %1 : vector<8x128xf32>
    %c0_1 = arith.constant 0 : index
    %c0_2 = arith.constant 0 : index
    %3 = vector.load %arg2[%c0_1, %c0_2] : memref<8x128xf32, #tpu.memory_space<vmem>>, vector<8x128xf32>
    tpu.vector_store %arg2[%c0_1, %c0_2], %2 {strides = array<i32>} : memref<8x128xf32, #tpu.memory_space<vmem>>, vector<8x128xf32>,
    return
  }
  func.func @transform_0(%arg0: i32) -> (i32, i32) {
    %c0_i32 = arith.constant 0 : i32
    %c0_i32_0 = arith.constant 0 : i32
    %c0_i32_1 = arith.constant 0 : i32
    return %c0_i32, %c0_i32_0 : i32, i32
  }
  func.func @transform_1(%arg0: i32) -> (i32, i32) {
    %c0_i32 = arith.constant 0 : i32
    %c0_i32_0 = arith.constant 0 : i32
    %c0_i32_1 = arith.constant 0 : i32
    return %c0_i32, %c0_i32_0 : i32, i32
  }
}

module attributes {stable_mosaic.version = 11 : i64} {
  func.func @_vae_kernel(%arg0: i32, %arg1: memref<8x256xf32, #tpu.memory_space<vmem>>, %arg2: memref<8x16xf32, #tpu.memory_space<vmem>>, %arg3: memref<256x256xf32, #tpu.memory_space<vmem>>, %arg4: memref<1x256xf32, #tpu.memory_space<vmem>>, %arg5: memref<256x34xf32, #tpu.memory_space<vmem>>, %arg6: memref<1x34xf32, #tpu.memory_space<vmem>>, %arg7: memref<16x10xf32, #tpu.memory_space<vmem>>, %arg8: memref<1x10xf32, #tpu.memory_space<vmem>>, %arg9: memref<16x128xf32, #tpu.memory_space<vmem>>, %arg10: memref<1x128xf32, #tpu.memory_space<vmem>>, %arg11: memref<128x512xf32, #tpu.memory_space<vmem>>, %arg12: memref<1x512xf32, #tpu.memory_space<vmem>>, %arg13: memref<8x256xf32, #tpu.memory_space<vmem>>, %arg14: memref<8x256xf32, #tpu.memory_space<vmem>>, %arg15: memref<8x256xf32, #tpu.memory_space<vmem>>, %arg16: memref<8x128xf32, #tpu.memory_space<vmem>>, %arg17: memref<8x128xf32, #tpu.memory_space<vmem>>) attributes {dimension_semantics = [#tpu.dimension_semantics<parallel>], iteration_bounds = array<i64: 2>, scalar_prefetch = 0 : i64, scratch_operands = 0 : i64, tpu.core_type = #tpu.core_type<tc>, window_params = [{transform_indices = @transform_0, window_bounds = array<i64: 8, 256>}, {transform_indices = @transform_1, window_bounds = array<i64: 8, 16>}, {pipeline_mode = #tpu.pipeline_mode<synchronous>, transform_indices = @transform_2, window_bounds = array<i64: 256, 256>}, {pipeline_mode = #tpu.pipeline_mode<synchronous>, transform_indices = @transform_3, window_bounds = array<i64: 1, 256>}, {pipeline_mode = #tpu.pipeline_mode<synchronous>, transform_indices = @transform_4, window_bounds = array<i64: 256, 34>}, {pipeline_mode = #tpu.pipeline_mode<synchronous>, transform_indices = @transform_5, window_bounds = array<i64: 1, 34>}, {pipeline_mode = #tpu.pipeline_mode<synchronous>, transform_indices = @transform_6, window_bounds = array<i64: 16, 10>}, {pipeline_mode = #tpu.pipeline_mode<synchronous>, transform_indices = @transform_7, window_bounds = array<i64: 1, 10>}, {pipeline_mode = #tpu.pipeline_mode<synchronous>, transform_indices = @transform_8, window_bounds = array<i64: 16, 128>}, {pipeline_mode = #tpu.pipeline_mode<synchronous>, transform_indices = @transform_9, window_bounds = array<i64: 1, 128>}, {pipeline_mode = #tpu.pipeline_mode<synchronous>, transform_indices = @transform_10, window_bounds = array<i64: 128, 512>}, {pipeline_mode = #tpu.pipeline_mode<synchronous>, transform_indices = @transform_11, window_bounds = array<i64: 1, 512>}, {transform_indices = @transform_12, window_bounds = array<i64: 8, 256>}, {transform_indices = @transform_13, window_bounds = array<i64: 8, 256>}, {transform_indices = @transform_14, window_bounds = array<i64: 8, 256>}, {transform_indices = @transform_15, window_bounds = array<i64: 8, 128>}, {transform_indices = @transform_16, window_bounds = array<i64: 8, 128>}]} {
    %c0 = arith.constant 0 : index
    %c0_0 = arith.constant 0 : index
    %0 = vector.load %arg1[%c0, %c0_0] : memref<8x256xf32, #tpu.memory_space<vmem>>, vector<8x256xf32>
    %cst = arith.constant dense<0.000000e+00> : vector<8xf32>
    %1 = vector.multi_reduction <add>, %0, %cst [1] : vector<8x256xf32> to vector<8xf32>
    %2 = vector.shape_cast %1 : vector<8xf32> to vector<8x1xf32>
    %3 = math.log %2 : vector<8x1xf32>
    %4 = math.log1p %0 : vector<8x256xf32>
    %c0_1 = arith.constant 0 : index
    %c0_2 = arith.constant 0 : index
    %5 = vector.load %arg3[%c0_1, %c0_2] : memref<256x256xf32, #tpu.memory_space<vmem>>, vector<256x256xf32>
    %cst_3 = arith.constant dense<0.000000e+00> : vector<8x256xf32>
    %6 = tpu.matmul %4, %5, %cst_3 {dimension_numbers = #tpu.dot_dimension_numbers<[1], [0], [0], [1], [0, 0, 1, 1], [], []>} : vector<8x256xf32>, vector<256x256xf32>, vector<8x256xf32> -> vector<8x256xf32>
    %c0_4 = arith.constant 0 : index
    %c0_5 = arith.constant 0 : index
    %7 = vector.load %arg4[%c0_4, %c0_5] : memref<1x256xf32, #tpu.memory_space<vmem>>, vector<1x256xf32>
    %8 = vector.broadcast %7 : vector<1x256xf32> to vector<8x256xf32>
    %9 = arith.addf %6, %8 : vector<8x256xf32>
    %cst_6 = arith.constant 0.000000e+00 : f32
    %10 = vector.broadcast %cst_6 : f32 to vector<8x256xf32>
    %11 = arith.maximumf %9, %10 : vector<8x256xf32>
    %c0_7 = arith.constant 0 : index
    %c0_8 = arith.constant 0 : index
    %12 = vector.load %arg5[%c0_7, %c0_8] : memref<256x34xf32, #tpu.memory_space<vmem>>, vector<256x34xf32>
    %cst_9 = arith.constant dense<0.000000e+00> : vector<8x34xf32>
    %13 = tpu.matmul %11, %12, %cst_9 {dimension_numbers = #tpu.dot_dimension_numbers<[1], [0], [0], [1], [0, 0, 1, 1], [], []>} : vector<8x256xf32>, vector<256x34xf32>, vector<8x34xf32> -> vector<8x34xf32>
    %c0_10 = arith.constant 0 : index
    %c0_11 = arith.constant 0 : index
    %14 = vector.load %arg6[%c0_10, %c0_11] : memref<1x34xf32, #tpu.memory_space<vmem>>, vector<1x34xf32>
    %15 = vector.broadcast %14 : vector<1x34xf32> to vector<8x34xf32>
    %16 = arith.addf %13, %15 : vector<8x34xf32>
    %17 = vector.extract_strided_slice %16 {offsets = [0, 0], sizes = [8, 16], strides = [1, 1]} : vector<8x34xf32> to vector<8x16xf32>
    %18 = vector.extract_strided_slice %16 {offsets = [0, 16], sizes = [8, 16], strides = [1, 1]} : vector<8x34xf32> to vector<8x16xf32>
    %19 = math.exp %18 : vector<8x16xf32>
    %cst_12 = arith.constant 9.99999974E-5 : f32
    %20 = vector.broadcast %cst_12 : f32 to vector<8x16xf32>
    %21 = arith.addf %19, %20 : vector<8x16xf32>
    %22 = math.sqrt %21 : vector<8x16xf32>
    %c0_13 = arith.constant 0 : index
    %c0_14 = arith.constant 0 : index
    %23 = vector.load %arg2[%c0_13, %c0_14] : memref<8x16xf32, #tpu.memory_space<vmem>>, vector<8x16xf32>
    %24 = arith.mulf %22, %23 : vector<8x16xf32>
    %25 = arith.addf %17, %24 : vector<8x16xf32>
    %26 = vector.extract_strided_slice %16 {offsets = [0, 32], sizes = [8, 1], strides = [1, 1]} : vector<8x34xf32> to vector<8x1xf32>
    %27 = vector.extract_strided_slice %16 {offsets = [0, 33], sizes = [8, 1], strides = [1, 1]} : vector<8x34xf32> to vector<8x1xf32>
    %28 = math.exp %27 : vector<8x1xf32>
    %cst_15 = arith.constant 9.99999974E-5 : f32
    %29 = vector.broadcast %cst_15 : f32 to vector<8x1xf32>
    %30 = arith.addf %28, %29 : vector<8x1xf32>
    %c0_16 = arith.constant 0 : index
    %c0_17 = arith.constant 0 : index
    %31 = vector.load %arg7[%c0_16, %c0_17] : memref<16x10xf32, #tpu.memory_space<vmem>>, vector<16x10xf32>
    %cst_18 = arith.constant dense<0.000000e+00> : vector<8x10xf32>
    %32 = tpu.matmul %17, %31, %cst_18 {dimension_numbers = #tpu.dot_dimension_numbers<[1], [0], [0], [1], [0, 0, 1, 1], [], []>} : vector<8x16xf32>, vector<16x10xf32>, vector<8x10xf32> -> vector<8x10xf32>
    %c0_19 = arith.constant 0 : index
    %c0_20 = arith.constant 0 : index
    %33 = vector.load %arg8[%c0_19, %c0_20] : memref<1x10xf32, #tpu.memory_space<vmem>>, vector<1x10xf32>
    %34 = vector.broadcast %33 : vector<1x10xf32> to vector<8x10xf32>
    %35 = arith.addf %32, %34 : vector<8x10xf32>
    %cst_21 = arith.constant 0.000000e+00 : f32
    %36 = vector.broadcast %cst_21 : f32 to vector<8x10xf32>
    %37 = arith.maximumf %35, %36 : vector<8x10xf32>
    %c0_22 = arith.constant 0 : index
    %c0_23 = arith.constant 0 : index
    %38 = vector.load %arg9[%c0_22, %c0_23] : memref<16x128xf32, #tpu.memory_space<vmem>>, vector<16x128xf32>
    %cst_24 = arith.constant dense<0.000000e+00> : vector<8x128xf32>
    %39 = tpu.matmul %25, %38, %cst_24 {dimension_numbers = #tpu.dot_dimension_numbers<[1], [0], [0], [1], [0, 0, 1, 1], [], []>} : vector<8x16xf32>, vector<16x128xf32>, vector<8x128xf32> -> vector<8x128xf32>
    %c0_25 = arith.constant 0 : index
    %c0_26 = arith.constant 0 : index
    %40 = vector.load %arg10[%c0_25, %c0_26] : memref<1x128xf32, #tpu.memory_space<vmem>>, vector<1x128xf32>
    %41 = vector.broadcast %40 : vector<1x128xf32> to vector<8x128xf32>
    %42 = arith.addf %39, %41 : vector<8x128xf32>
    %cst_27 = arith.constant 0.000000e+00 : f32
    %43 = vector.broadcast %cst_27 : f32 to vector<8x128xf32>
    %44 = arith.maximumf %42, %43 : vector<8x128xf32>
    %c0_28 = arith.constant 0 : index
    %c0_29 = arith.constant 0 : index
    %45 = vector.load %arg11[%c0_28, %c0_29] : memref<128x512xf32, #tpu.memory_space<vmem>>, vector<128x512xf32>
    %cst_30 = arith.constant dense<0.000000e+00> : vector<8x512xf32>
    %46 = tpu.matmul %44, %45, %cst_30 {dimension_numbers = #tpu.dot_dimension_numbers<[1], [0], [0], [1], [0, 0, 1, 1], [], []>} : vector<8x128xf32>, vector<128x512xf32>, vector<8x512xf32> -> vector<8x512xf32>
    %c0_31 = arith.constant 0 : index
    %c0_32 = arith.constant 0 : index
    %47 = vector.load %arg12[%c0_31, %c0_32] : memref<1x512xf32, #tpu.memory_space<vmem>>, vector<1x512xf32>
    %48 = vector.broadcast %47 : vector<1x512xf32> to vector<8x512xf32>
    %49 = arith.addf %46, %48 : vector<8x512xf32>
    %50 = vector.extract_strided_slice %49 {offsets = [0, 0], sizes = [8, 256], strides = [1, 1]} : vector<8x512xf32> to vector<8x256xf32>
    %51 = vector.extract_strided_slice %49 {offsets = [0, 256], sizes = [8, 256], strides = [1, 1]} : vector<8x512xf32> to vector<8x256xf32>
    %cst_33 = arith.constant dense<0xFF800000> : vector<8xf32>
    %52 = vector.multi_reduction <maximumf>, %50, %cst_33 [1] : vector<8x256xf32> to vector<8xf32>
    %53 = vector.shape_cast %52 : vector<8xf32> to vector<8x1xf32>
    %54 = vector.broadcast %53 : vector<8x1xf32> to vector<8x256xf32>
    %55 = arith.subf %50, %54 : vector<8x256xf32>
    %56 = math.exp %55 : vector<8x256xf32>
    %cst_34 = arith.constant dense<0.000000e+00> : vector<8xf32>
    %57 = vector.multi_reduction <add>, %56, %cst_34 [1] : vector<8x256xf32> to vector<8xf32>
    %58 = vector.shape_cast %57 : vector<8xf32> to vector<8x1xf32>
    %59 = tpu.reciprocal %58 {approx = true} : vector<8x1xf32> -> vector<8x1xf32>
    %60 = arith.mulf %58, %59 : vector<8x1xf32>
    %cst_35 = arith.constant 2.000000e+00 : f32
    %61 = vector.broadcast %cst_35 : f32 to vector<8x1xf32>
    %62 = arith.subf %61, %60 : vector<8x1xf32>
    %63 = arith.mulf %59, %62 : vector<8x1xf32>
    %64 = vector.broadcast %63 : vector<8x1xf32> to vector<8x256xf32>
    %65 = arith.mulf %56, %64 : vector<8x256xf32>
    %66 = vector.broadcast %2 : vector<8x1xf32> to vector<8x256xf32>
    %67 = arith.mulf %66, %65 : vector<8x256xf32>
    %c0_36 = arith.constant 0 : index
    %c0_37 = arith.constant 0 : index
    %68 = vector.load %arg13[%c0_36, %c0_37] : memref<8x256xf32, #tpu.memory_space<vmem>>, vector<8x256xf32>
    tpu.vector_store %arg13[%c0_36, %c0_37], %65 {strides = array<i32>} : memref<8x256xf32, #tpu.memory_space<vmem>>, vector<8x256xf32>,
    %c0_38 = arith.constant 0 : index
    %c0_39 = arith.constant 0 : index
    %69 = vector.load %arg14[%c0_38, %c0_39] : memref<8x256xf32, #tpu.memory_space<vmem>>, vector<8x256xf32>
    tpu.vector_store %arg14[%c0_38, %c0_39], %67 {strides = array<i32>} : memref<8x256xf32, #tpu.memory_space<vmem>>, vector<8x256xf32>,
    %c0_40 = arith.constant 0 : index
    %c0_41 = arith.constant 0 : index
    %70 = vector.load %arg15[%c0_40, %c0_41] : memref<8x256xf32, #tpu.memory_space<vmem>>, vector<8x256xf32>
    tpu.vector_store %arg15[%c0_40, %c0_41], %51 {strides = array<i32>} : memref<8x256xf32, #tpu.memory_space<vmem>>, vector<8x256xf32>,
    %c0_42 = arith.constant 0 : index
    %c0_43 = arith.constant 0 : index
    %71 = vector.load %arg16[%c0_42, %c0_43] : memref<8x128xf32, #tpu.memory_space<vmem>>, vector<8x128xf32>
    tpu.vector_store %arg16[%c0_42, %c0_43], %44 {strides = array<i32>} : memref<8x128xf32, #tpu.memory_space<vmem>>, vector<8x128xf32>,
    %cst_44 = arith.constant 0.000000e+00 : f32
    %72 = vector.broadcast %cst_44 : f32 to vector<8x67xf32>
    %73 = tpu.concatenate %17, %21, %25, %37, %26, %30, %3, %72 in 1 : vector<8x16xf32>, vector<8x16xf32>, vector<8x16xf32>, vector<8x10xf32>, vector<8x1xf32>, vector<8x1xf32>, vector<8x1xf32>, vector<8x67xf32> -> vector<8x128xf32>
    %c0_45 = arith.constant 0 : index
    %c0_46 = arith.constant 0 : index
    %74 = vector.load %arg17[%c0_45, %c0_46] : memref<8x128xf32, #tpu.memory_space<vmem>>, vector<8x128xf32>
    tpu.vector_store %arg17[%c0_45, %c0_46], %73 {strides = array<i32>} : memref<8x128xf32, #tpu.memory_space<vmem>>, vector<8x128xf32>,
    return
  }
  func.func @transform_0(%arg0: i32) -> (i32, i32) {
    %c0_i32 = arith.constant 0 : i32
    %c0_i32_0 = arith.constant 0 : i32
    return %arg0, %c0_i32 : i32, i32
  }
  func.func @transform_1(%arg0: i32) -> (i32, i32) {
    %c0_i32 = arith.constant 0 : i32
    %c0_i32_0 = arith.constant 0 : i32
    return %arg0, %c0_i32 : i32, i32
  }
  func.func @transform_2(%arg0: i32) -> (i32, i32) {
    %c0_i32 = arith.constant 0 : i32
    %c0_i32_0 = arith.constant 0 : i32
    %c0_i32_1 = arith.constant 0 : i32
    return %c0_i32, %c0_i32_0 : i32, i32
  }
  func.func @transform_3(%arg0: i32) -> (i32, i32) {
    %c0_i32 = arith.constant 0 : i32
    %c0_i32_0 = arith.constant 0 : i32
    %c0_i32_1 = arith.constant 0 : i32
    return %c0_i32, %c0_i32_0 : i32, i32
  }
  func.func @transform_4(%arg0: i32) -> (i32, i32) {
    %c0_i32 = arith.constant 0 : i32
    %c0_i32_0 = arith.constant 0 : i32
    %c0_i32_1 = arith.constant 0 : i32
    return %c0_i32, %c0_i32_0 : i32, i32
  }
  func.func @transform_5(%arg0: i32) -> (i32, i32) {
    %c0_i32 = arith.constant 0 : i32
    %c0_i32_0 = arith.constant 0 : i32
    %c0_i32_1 = arith.constant 0 : i32
    return %c0_i32, %c0_i32_0 : i32, i32
  }
  func.func @transform_6(%arg0: i32) -> (i32, i32) {
    %c0_i32 = arith.constant 0 : i32
    %c0_i32_0 = arith.constant 0 : i32
    %c0_i32_1 = arith.constant 0 : i32
    return %c0_i32, %c0_i32_0 : i32, i32
  }
  func.func @transform_7(%arg0: i32) -> (i32, i32) {
    %c0_i32 = arith.constant 0 : i32
    %c0_i32_0 = arith.constant 0 : i32
    %c0_i32_1 = arith.constant 0 : i32
    return %c0_i32, %c0_i32_0 : i32, i32
  }
  func.func @transform_8(%arg0: i32) -> (i32, i32) {
    %c0_i32 = arith.constant 0 : i32
    %c0_i32_0 = arith.constant 0 : i32
    %c0_i32_1 = arith.constant 0 : i32
    return %c0_i32, %c0_i32_0 : i32, i32
  }
  func.func @transform_9(%arg0: i32) -> (i32, i32) {
    %c0_i32 = arith.constant 0 : i32
    %c0_i32_0 = arith.constant 0 : i32
    %c0_i32_1 = arith.constant 0 : i32
    return %c0_i32, %c0_i32_0 : i32, i32
  }
  func.func @transform_10(%arg0: i32) -> (i32, i32) {
    %c0_i32 = arith.constant 0 : i32
    %c0_i32_0 = arith.constant 0 : i32
    %c0_i32_1 = arith.constant 0 : i32
    return %c0_i32, %c0_i32_0 : i32, i32
  }
  func.func @transform_11(%arg0: i32) -> (i32, i32) {
    %c0_i32 = arith.constant 0 : i32
    %c0_i32_0 = arith.constant 0 : i32
    %c0_i32_1 = arith.constant 0 : i32
    return %c0_i32, %c0_i32_0 : i32, i32
  }
  func.func @transform_12(%arg0: i32) -> (i32, i32) {
    %c0_i32 = arith.constant 0 : i32
    %c0_i32_0 = arith.constant 0 : i32
    return %arg0, %c0_i32 : i32, i32
  }
  func.func @transform_13(%arg0: i32) -> (i32, i32) {
    %c0_i32 = arith.constant 0 : i32
    %c0_i32_0 = arith.constant 0 : i32
    return %arg0, %c0_i32 : i32, i32
  }
  func.func @transform_14(%arg0: i32) -> (i32, i32) {
    %c0_i32 = arith.constant 0 : i32
    %c0_i32_0 = arith.constant 0 : i32
    return %arg0, %c0_i32 : i32, i32
  }
  func.func @transform_15(%arg0: i32) -> (i32, i32) {
    %c0_i32 = arith.constant 0 : i32
    %c0_i32_0 = arith.constant 0 : i32
    return %arg0, %c0_i32 : i32, i32
  }
  func.func @transform_16(%arg0: i32) -> (i32, i32) {
    %c0_i32 = arith.constant 0 : i32
    %c0_i32_0 = arith.constant 0 : i32
    return %arg0, %c0_i32 : i32, i32
  }
}

</mosaic_0001>

<llo_original>
// kernel: tpu_custom_call.1
$region0: #{tpu_custom_call.1}
  #allocation0 [shape = 'u32[]', space=smem, size = 0x4, offset = 0x4, fixed_abs, tag = 'smem constant byte address 0x4 - core index']
  #allocation1 [shape = 'u32[72,128]{1,0:T(1,128)}', space=vmem, size = 0x9000, scoped, tag = 'internal scratch']
  %s0 = inlined_call_operand.hbm [shape: f32[8,128], index: 0, kind: input, shape index: {}]
  %s1 = inlined_call_operand.hbm [shape: f32[8,128], index: 1, kind: output, shape index: {}]
  %s2 = sld [smem:[#allocation0]]
  $region41: #{tpu_custom_call.1} parent=0
    _
  %s4 = ssub.s32 1, %s2
  %s5 = scalar_select 0, %s4, %s2
  $region1: #{tpu_custom_call.1} parent=0
    #allocation2 [shape = 'u8[4096]{0}', space=vmem, size = 0x1000, scoped, tag = 'input window, operand 0, single buffered']
    #allocation3 [shape = 's32[2]{0}', space=sflag, size = 0x8, scoped, tag = 'scoped memory for tpu_custom_call.1']
    #allocation4 [shape = 's32[2]{0}', space=sflag, size = 0x8, scoped, tag = 'scoped memory for tpu_custom_call.1']
    #allocation5 [shape = 'u8[4096]{0}', space=vmem, size = 0x1000, scoped, tag = 'output window, operand 0, single buffered']
    %6 = vsyncpa [#allocation3], 0
    %7 = vsyncpa [#allocation4], 0
    loop: start=0, step=1, limit=4
    $region2: #{tpu_custom_call.1} parent=1 // loop_pre_header
      _
    $region3: #{tpu_custom_call.1} parent=1 // loop_header
      %s9 = sphi 0, %s13
      %p10 = scmp.ge.s32.totalorder %s9, 4
      %s17 = sphi 0, %s17
      %s19 = sphi 0, %s17
      %s20 = sphi 0, %s19
      %s34 = sphi 0, %s20
      %s38 = sphi 0, %s38
      %s40 = sphi 0, %s38
      %s41 = sphi 0, %s40
      %s55 = sphi 0, %s41
    $region4: #{tpu_custom_call.1} parent=1 // loop_header_branch
      %12 = sbr.rel (%p10) target = $region8
    $region5: #{tpu_custom_call.1} parent=1 // loop_body
      %s14 = ssub.s32 %s9, 1
      %s15 = ssub.s32 %s9, 2
      %s16 = sadd.s32 %s9, 1
      %s18 = sadd.s32 %s17, 1
      %p21 = scmp.eq.s32.totalorder %s9, 1
      %p22 = scmp.ne.s32.totalorder %s17, %s19
      %p23 = scmp.eq.s32.totalorder %s9, 0
      %p24 = por %p22, %p23
      %p25 = scmp.ne.s32.totalorder %s17, %s19
      %p26 = scmp.eq.s32.totalorder %s14, 1
      %p27 = por %p25, %p26
      %p28 = scmp.ne.s32.totalorder %s19, %s20
      %p29 = scmp.eq.s32.totalorder %s14, 0
      %p30 = por %p28, %p29
      %p31 = scmp.ne.s32.totalorder %s19, %s20
      %p32 = scmp.eq.s32.totalorder %s15, 1
      %p33 = por %p31, %p32
      %p35 = scmp.ne.s32.totalorder %s20, %s34
      %p36 = scmp.eq.s32.totalorder %s15, 0
      %p37 = por %p35, %p36
      %s39 = sadd.s32 %s38, 1
      %p42 = scmp.eq.s32.totalorder %s9, 1
      %p43 = scmp.ne.s32.totalorder %s38, %s40
      %p44 = scmp.eq.s32.totalorder %s9, 0
      %p45 = por %p43, %p44
      %p46 = scmp.ne.s32.totalorder %s38, %s40
      %p47 = scmp.eq.s32.totalorder %s14, 1
      %p48 = por %p46, %p47
      %p49 = scmp.ne.s32.totalorder %s40, %s41
      %p50 = scmp.eq.s32.totalorder %s14, 0
      %p51 = por %p49, %p50
      %p52 = scmp.ne.s32.totalorder %s40, %s41
      %p53 = scmp.eq.s32.totalorder %s15, 1
      %p54 = por %p52, %p53
      %p56 = scmp.ne.s32.totalorder %s41, %s55
      %p57 = scmp.eq.s32.totalorder %s15, 0
      %p58 = por %p56, %p57
      %p59 = scmp.le.s32.totalorder 1, %s9
      %p60 = scmp.lt.s32.totalorder %s9, 3
      %p61 = pnand %p59, %p60
      %p62 = pneg %p61
      // Predicated region
      $region9: #{tpu_custom_call.1} parent=5 // pred_check
        _
      $region10: #{tpu_custom_call.1} parent=5 // pred_check_branch
        %64 = sbr.rel (%p61) target = $region12
      $region11: #{tpu_custom_call.1} parent=5 // pred_region
        %s65 = ssub.s32 %s9, 1
        // Predicated region
        $region13: #{tpu_custom_call.1} parent=11 // pred_check
          %p66 = pneg %p30
        $region14: #{tpu_custom_call.1} parent=11 // pred_check_branch
          %68 = sbr.rel (%p66) target = $region16
        $region15: #{tpu_custom_call.1} parent=11 // pred_region
          %70 = vsyncadd [#allocation3], 0
          %s72 = sshll.u32 %s0, 4
          %s73 = int_to_ptr.hbm [resolvable:$true] %s72
          %s74 = sshll.u32 [#allocation2], 4
          %s75 = int_to_ptr.vmem [resolvable:$true] %s74
          %77 = dma.hbm_to_vmem [thread:$0]  %s73, 128, %s75, [#allocation3]
        $region16: #{tpu_custom_call.1} parent=11 // pred_fallthru
          _
      $region12: #{tpu_custom_call.1} parent=5 // pred_fallthru
        _
      %p78 = scmp.lt.s32.totalorder %s9, 2
      // Predicated region
      $region17: #{tpu_custom_call.1} parent=5 // pred_check
        %p79 = pneg %p78
      $region18: #{tpu_custom_call.1} parent=5 // pred_check_branch
        %81 = sbr.rel (%p79) target = $region20
      $region19: #{tpu_custom_call.1} parent=5 // pred_region
        _
      $region20: #{tpu_custom_call.1} parent=5 // pred_fallthru
        _
      %p82 = scmp.le.s32.totalorder 1, %s9
      %p83 = scmp.lt.s32.totalorder %s9, 3
      %p84 = pnand %p82, %p83
      %p85 = pneg %p84
      // Predicated region
      $region21: #{tpu_custom_call.1} parent=5 // pred_check
        _
      $region22: #{tpu_custom_call.1} parent=5 // pred_check_branch
        %87 = sbr.rel (%p84) target = $region24
      $region23: #{tpu_custom_call.1} parent=5 // pred_region
        %s88 = ssub.s32 %s9, 1
        // Predicated region
        $region25: #{tpu_custom_call.1} parent=23 // pred_check
          %p89 = pneg %p30
        $region26: #{tpu_custom_call.1} parent=23 // pred_check_branch
          %91 = sbr.rel (%p89) target = $region28
        $region27: #{tpu_custom_call.1} parent=23 // pred_region
          %93 = dma.done [#allocation3], 128
        $region28: #{tpu_custom_call.1} parent=23 // pred_fallthru
          _
        %p94 = pneg %p30
        %p95 = pneg %p27
        %p96 = pneg %p51
        %p97 = pneg %p48
        %v98 = vld [vmem:[#allocation2] sm:$0xff]
        %v99 = vmul.f32 %v98, 2.0
        %100 = vst [vmem:[#allocation5] sm:$0xff] %v99
        // Predicated region
        $region29: #{tpu_custom_call.1} parent=23 // pred_check
          %p101 = pneg %p48
        $region30: #{tpu_custom_call.1} parent=23 // pred_check_branch
          %103 = sbr.rel (%p101) target = $region32
        $region31: #{tpu_custom_call.1} parent=23 // pred_region
          %105 = vsyncadd [#allocation4], 0
          %s107 = sshll.u32 [#allocation5], 4
          %s108 = int_to_ptr.vmem [resolvable:$true] %s107
          %s109 = sshll.u32 %s1, 4
          %s110 = int_to_ptr.hbm [resolvable:$true] %s109
          %112 = dma.vmem_to_hbm [thread:$0]  %s108, 128, %s110, [#allocation4]
        $region32: #{tpu_custom_call.1} parent=23 // pred_fallthru
          _
        // Predicated region
        $region33: #{tpu_custom_call.1} parent=23 // pred_check
          %p113 = pneg %p48
        $region34: #{tpu_custom_call.1} parent=23 // pred_check_branch
          %115 = sbr.rel (%p113) target = $region36
        $region35: #{tpu_custom_call.1} parent=23 // pred_region
          %117 = dma.done [#allocation4], 128
        $region36: #{tpu_custom_call.1} parent=23 // pred_fallthru
          _
      $region24: #{tpu_custom_call.1} parent=5 // pred_fallthru
        _
      %p118 = scmp.le.s32.totalorder 2, %s9
      // Predicated region
      $region37: #{tpu_custom_call.1} parent=5 // pred_check
        %p119 = pneg %p118
      $region38: #{tpu_custom_call.1} parent=5 // pred_check_branch
        %121 = sbr.rel (%p119) target = $region40
      $region39: #{tpu_custom_call.1} parent=5 // pred_region
        %s122 = ssub.s32 %s9, 2
      $region40: #{tpu_custom_call.1} parent=5 // pred_fallthru
        _
    $region6: #{tpu_custom_call.1} parent=1 // loop_footer
      %s13 = sadd.s32 1, %s9
    $region7: #{tpu_custom_call.1} parent=1 // loop_footer_branch
      %8 = sbr.rel target = $region3
    $region8: #{tpu_custom_call.1} parent=1 // loop_exit
      _
    %123 = vsyncpa [#allocation3], 1
    %s124 = scalar_lea.sflag [#allocation3], 1
    %125 = vsyncpa %s124, 1
    %126 = vsyncpa [#allocation4], 1
    %s127 = scalar_lea.sflag [#allocation4], 1
    %128 = vsyncpa %s127, 1

// kernel: tpu_custom_call.1
$region0: #{tpu_custom_call.1}
  #allocation0 [shape = 'u32[]', space=smem, size = 0x4, offset = 0x4, fixed_abs, tag = 'smem constant byte address 0x4 - core index']
  #allocation1 [shape = 'u32[72,128]{1,0:T(1,128)}', space=vmem, size = 0x9000, scoped, tag = 'internal scratch']
  %s0 = inlined_call_operand.vmem [shape: f32[16,256], index: 0, kind: input, shape index: {}]
  %s1 = inlined_call_operand.vmem [shape: f32[16,16], index: 1, kind: input, shape index: {}]
  %s2 = inlined_call_operand.hbm [shape: f32[256,256], index: 2, kind: input, shape index: {}]
  %s3 = inlined_call_operand.vmem [shape: f32[1,256], index: 3, kind: input, shape index: {}]
  %s4 = inlined_call_operand.vmem [shape: f32[256,34], index: 4, kind: input, shape index: {}]
  %s5 = inlined_call_operand.vmem [shape: f32[1,34], index: 5, kind: input, shape index: {}]
  %s6 = inlined_call_operand.vmem [shape: f32[16,10], index: 6, kind: input, shape index: {}]
  %s7 = inlined_call_operand.vmem [shape: f32[1,10], index: 7, kind: input, shape index: {}]
  %s8 = inlined_call_operand.vmem [shape: f32[16,128], index: 8, kind: input, shape index: {}]
  %s9 = inlined_call_operand.vmem [shape: f32[1,128], index: 9, kind: input, shape index: {}]
  %s10 = inlined_call_operand.hbm [shape: f32[128,512], index: 10, kind: input, shape index: {}]
  %s11 = inlined_call_operand.vmem [shape: f32[1,512], index: 11, kind: input, shape index: {}]
  %s12 = inlined_call_operand.hbm [shape: f32[16,256], index: 12, kind: output, shape index: {0}]
  %s13 = inlined_call_operand.hbm [shape: f32[16,256], index: 13, kind: output, shape index: {1}]
  %s14 = inlined_call_operand.hbm [shape: f32[16,256], index: 14, kind: output, shape index: {2}]
  %s15 = inlined_call_operand.hbm [shape: f32[16,128], index: 15, kind: output, shape index: {3}]
  %s16 = inlined_call_operand.hbm [shape: f32[16,128], index: 16, kind: output, shape index: {4}]
  %17 = xla_tuple %s12, %s13, %s14, %s15, %s16
  %s18 = sld [smem:[#allocation0]]
  $region121: #{tpu_custom_call.1} parent=0
    _
  %s20 = ssub.s32 1, %s18
  %s21 = scalar_select 0, %s20, %s18
  $region1: #{tpu_custom_call.1} parent=0
    #allocation2 [shape = 'u8[262144]{0}', space=vmem, size = 0x40000, scoped, tag = 'input window, operand 2, single buffered']
    #allocation3 [shape = 's32[2]{0}', space=sflag, size = 0x8, scoped, tag = 'scoped memory for tpu_custom_call.1']
    #allocation4 [shape = 's32[2]{0}', space=sflag, size = 0x8, scoped, tag = 'scoped memory for tpu_custom_call.1']
    #allocation5 [shape = 'u8[262144]{0}', space=vmem, size = 0x40000, scoped, tag = 'input window, operand 10, single buffered']
    #allocation6 [shape = 's32[1]{0}', space=sflag, size = 0x4, scoped, tag = 'scoped memory for tpu_custom_call.1']
    #allocation7 [shape = 'u8[16384]{0}', space=vmem, size = 0x4000, scoped, tag = 'output window, operand 0']
    #allocation8 [shape = 'u8[16384]{0}', space=vmem, size = 0x4000, scoped, tag = 'output window, operand 1']
    #allocation9 [shape = 's32[2]{0}', space=sflag, size = 0x8, scoped, tag = 'scoped memory for tpu_custom_call.1']
    #allocation10 [shape = 'u8[16384]{0}', space=vmem, size = 0x4000, scoped, tag = 'output window, operand 2']
    #allocation11 [shape = 'u8[8192]{0}', space=vmem, size = 0x2000, scoped, tag = 'output window, operand 3']
    #allocation12 [shape = 's32[2]{0}', space=sflag, size = 0x8, scoped, tag = 'scoped memory for tpu_custom_call.1']
    #allocation13 [shape = 'u8[8192]{0}', space=vmem, size = 0x2000, scoped, tag = 'output window, operand 4']
    %22 = vsyncpa [#allocation3], 0
    %23 = vsyncpa [#allocation6], 0
    %24 = vsyncpa [#allocation4], 0
    %s25 = scalar_lea.sflag [#allocation4], 1
    %26 = vsyncpa %s25, 0
    %27 = vsyncpa [#allocation9], 0
    %s28 = scalar_lea.sflag [#allocation9], 1
    %29 = vsyncpa %s28, 0
    %30 = vsyncpa [#allocation12], 0
    %s31 = scalar_lea.sflag [#allocation12], 1
    %32 = vsyncpa %s31, 0
    loop: start=0, step=1, limit=4
    $region2: #{tpu_custom_call.1} parent=1 // loop_pre_header
      _
    $region3: #{tpu_custom_call.1} parent=1 // loop_header
      %s34 = sphi 0, %s38
      %p35 = scmp.ge.s32.totalorder %s34, 4
      %s44 = sphi 0, %s46
      %s47 = sphi 0, %s44
      %s48 = sphi 0, %s47
      %s64 = sphi 0, %s48
      %s70 = sphi 0, %s72
      %s73 = sphi 0, %s70
      %s74 = sphi 0, %s73
      %s90 = sphi 0, %s74
      %s94 = sphi 0, %s94
      %s96 = sphi 0, %s94
      %s97 = sphi 0, %s96
      %s111 = sphi 0, %s97
      %s115 = sphi 0, %s115
      %s117 = sphi 0, %s115
      %s118 = sphi 0, %s117
      %s132 = sphi 0, %s118
      %s136 = sphi 0, %s136
      %s138 = sphi 0, %s136
      %s139 = sphi 0, %s138
      %s153 = sphi 0, %s139
      %s157 = sphi 0, %s157
      %s159 = sphi 0, %s157
      %s160 = sphi 0, %s159
      %s174 = sphi 0, %s160
      %s178 = sphi 0, %s178
      %s180 = sphi 0, %s178
      %s181 = sphi 0, %s180
      %s195 = sphi 0, %s181
      %s199 = sphi 0, %s199
      %s201 = sphi 0, %s199
      %s202 = sphi 0, %s201
      %s216 = sphi 0, %s202
      %s220 = sphi 0, %s220
      %s222 = sphi 0, %s220
      %s223 = sphi 0, %s222
      %s237 = sphi 0, %s223
      %s241 = sphi 0, %s241
      %s243 = sphi 0, %s241
      %s244 = sphi 0, %s243
      %s258 = sphi 0, %s244
      %s262 = sphi 0, %s262
      %s264 = sphi 0, %s262
      %s265 = sphi 0, %s264
      %s279 = sphi 0, %s265
      %s283 = sphi 0, %s283
      %s285 = sphi 0, %s283
      %s286 = sphi 0, %s285
      %s300 = sphi 0, %s286
      %s306 = sphi 0, %s308
      %s309 = sphi 0, %s306
      %s310 = sphi 0, %s309
      %s326 = sphi 0, %s310
      %s332 = sphi 0, %s334
      %s335 = sphi 0, %s332
      %s336 = sphi 0, %s335
      %s352 = sphi 0, %s336
      %s358 = sphi 0, %s360
      %s361 = sphi 0, %s358
      %s362 = sphi 0, %s361
      %s378 = sphi 0, %s362
      %s384 = sphi 0, %s386
      %s387 = sphi 0, %s384
      %s388 = sphi 0, %s387
      %s404 = sphi 0, %s388
      %s410 = sphi 0, %s412
      %s413 = sphi 0, %s410
      %s414 = sphi 0, %s413
      %s430 = sphi 0, %s414
    $region4: #{tpu_custom_call.1} parent=1 // loop_header_branch
      %37 = sbr.rel (%p35) target = $region8
    $region5: #{tpu_custom_call.1} parent=1 // loop_body
      %s39 = ssub.s32 %s34, 1
      %s40 = ssub.s32 %s34, 2
      %s41 = sadd.s32 %s34, 1
      %s42 = ssub.s32 %s34, %s41
      %p43 = scmp.eq.s32.totalorder %s42, 0
      %s45 = sadd.s32 %s44, 1
      %s46 = scalar_select %p43, %s44, %s45
      %p49 = pneg %p43
      %p50 = scmp.eq.s32.totalorder %s34, 1
      %p51 = por %p49, %p50
      %p52 = scmp.ne.s32.totalorder %s44, %s47
      %p53 = scmp.eq.s32.totalorder %s34, 0
      %p54 = por %p52, %p53
      %p55 = scmp.ne.s32.totalorder %s44, %s47
      %p56 = scmp.eq.s32.totalorder %s39, 1
      %p57 = por %p55, %p56
      %p58 = scmp.ne.s32.totalorder %s47, %s48
      %p59 = scmp.eq.s32.totalorder %s39, 0
      %p60 = por %p58, %p59
      %p61 = scmp.ne.s32.totalorder %s47, %s48
      %p62 = scmp.eq.s32.totalorder %s40, 1
      %p63 = por %p61, %p62
      %p65 = scmp.ne.s32.totalorder %s48, %s64
      %p66 = scmp.eq.s32.totalorder %s40, 0
      %p67 = por %p65, %p66
      %s68 = ssub.s32 %s34, %s41
      %p69 = scmp.eq.s32.totalorder %s68, 0
      %s71 = sadd.s32 %s70, 1
      %s72 = scalar_select %p69, %s70, %s71
      %p75 = pneg %p69
      %p76 = scmp.eq.s32.totalorder %s34, 1
      %p77 = por %p75, %p76
      %p78 = scmp.ne.s32.totalorder %s70, %s73
      %p79 = scmp.eq.s32.totalorder %s34, 0
      %p80 = por %p78, %p79
      %p81 = scmp.ne.s32.totalorder %s70, %s73
      %p82 = scmp.eq.s32.totalorder %s39, 1
      %p83 = por %p81, %p82
      %p84 = scmp.ne.s32.totalorder %s73, %s74
      %p85 = scmp.eq.s32.totalorder %s39, 0
      %p86 = por %p84, %p85
      %p87 = scmp.ne.s32.totalorder %s73, %s74
      %p88 = scmp.eq.s32.totalorder %s40, 1
      %p89 = por %p87, %p88
      %p91 = scmp.ne.s32.totalorder %s74, %s90
      %p92 = scmp.eq.s32.totalorder %s40, 0
      %p93 = por %p91, %p92
      %s95 = sadd.s32 %s94, 1
      %p98 = scmp.eq.s32.totalorder %s34, 1
      %p99 = scmp.ne.s32.totalorder %s94, %s96
      %p100 = scmp.eq.s32.totalorder %s34, 0
      %p101 = por %p99, %p100
      %p102 = scmp.ne.s32.totalorder %s94, %s96
      %p103 = scmp.eq.s32.totalorder %s39, 1
      %p104 = por %p102, %p103
      %p105 = scmp.ne.s32.totalorder %s96, %s97
      %p106 = scmp.eq.s32.totalorder %s39, 0
      %p107 = por %p105, %p106
      %p108 = scmp.ne.s32.totalorder %s96, %s97
      %p109 = scmp.eq.s32.totalorder %s40, 1
      %p110 = por %p108, %p109
      %p112 = scmp.ne.s32.totalorder %s97, %s111
      %p113 = scmp.eq.s32.totalorder %s40, 0
      %p114 = por %p112, %p113
      %s116 = sadd.s32 %s115, 1
      %p119 = scmp.eq.s32.totalorder %s34, 1
      %p120 = scmp.ne.s32.totalorder %s115, %s117
      %p121 = scmp.eq.s32.totalorder %s34, 0
      %p122 = por %p120, %p121
      %p123 = scmp.ne.s32.totalorder %s115, %s117
      %p124 = scmp.eq.s32.totalorder %s39, 1
      %p125 = por %p123, %p124
      %p126 = scmp.ne.s32.totalorder %s117, %s118
      %p127 = scmp.eq.s32.totalorder %s39, 0
      %p128 = por %p126, %p127
      %p129 = scmp.ne.s32.totalorder %s117, %s118
      %p130 = scmp.eq.s32.totalorder %s40, 1
      %p131 = por %p129, %p130
      %p133 = scmp.ne.s32.totalorder %s118, %s132
      %p134 = scmp.eq.s32.totalorder %s40, 0
      %p135 = por %p133, %p134
      %s137 = sadd.s32 %s136, 1
      %p140 = scmp.eq.s32.totalorder %s34, 1
      %p141 = scmp.ne.s32.totalorder %s136, %s138
      %p142 = scmp.eq.s32.totalorder %s34, 0
      %p143 = por %p141, %p142
      %p144 = scmp.ne.s32.totalorder %s136, %s138
      %p145 = scmp.eq.s32.totalorder %s39, 1
      %p146 = por %p144, %p145
      %p147 = scmp.ne.s32.totalorder %s138, %s139
      %p148 = scmp.eq.s32.totalorder %s39, 0
      %p149 = por %p147, %p148
      %p150 = scmp.ne.s32.totalorder %s138, %s139
      %p151 = scmp.eq.s32.totalorder %s40, 1
      %p152 = por %p150, %p151
      %p154 = scmp.ne.s32.totalorder %s139, %s153
      %p155 = scmp.eq.s32.totalorder %s40, 0
      %p156 = por %p154, %p155
      %s158 = sadd.s32 %s157, 1
      %p161 = scmp.eq.s32.totalorder %s34, 1
      %p162 = scmp.ne.s32.totalorder %s157, %s159
      %p163 = scmp.eq.s32.totalorder %s34, 0
      %p164 = por %p162, %p163
      %p165 = scmp.ne.s32.totalorder %s157, %s159
      %p166 = scmp.eq.s32.totalorder %s39, 1
      %p167 = por %p165, %p166
      %p168 = scmp.ne.s32.totalorder %s159, %s160
      %p169 = scmp.eq.s32.totalorder %s39, 0
      %p170 = por %p168, %p169
      %p171 = scmp.ne.s32.totalorder %s159, %s160
      %p172 = scmp.eq.s32.totalorder %s40, 1
      %p173 = por %p171, %p172
      %p175 = scmp.ne.s32.totalorder %s160, %s174
      %p176 = scmp.eq.s32.totalorder %s40, 0
      %p177 = por %p175, %p176
      %s179 = sadd.s32 %s178, 1
      %p182 = scmp.eq.s32.totalorder %s34, 1
      %p183 = scmp.ne.s32.totalorder %s178, %s180
      %p184 = scmp.eq.s32.totalorder %s34, 0
      %p185 = por %p183, %p184
      %p186 = scmp.ne.s32.totalorder %s178, %s180
      %p187 = scmp.eq.s32.totalorder %s39, 1
      %p188 = por %p186, %p187
      %p189 = scmp.ne.s32.totalorder %s180, %s181
      %p190 = scmp.eq.s32.totalorder %s39, 0
      %p191 = por %p189, %p190
      %p192 = scmp.ne.s32.totalorder %s180, %s181
      %p193 = scmp.eq.s32.totalorder %s40, 1
      %p194 = por %p192, %p193
      %p196 = scmp.ne.s32.totalorder %s181, %s195
      %p197 = scmp.eq.s32.totalorder %s40, 0
      %p198 = por %p196, %p197
      %s200 = sadd.s32 %s199, 1
      %p203 = scmp.eq.s32.totalorder %s34, 1
      %p204 = scmp.ne.s32.totalorder %s199, %s201
      %p205 = scmp.eq.s32.totalorder %s34, 0
      %p206 = por %p204, %p205
      %p207 = scmp.ne.s32.totalorder %s199, %s201
      %p208 = scmp.eq.s32.totalorder %s39, 1
      %p209 = por %p207, %p208
      %p210 = scmp.ne.s32.totalorder %s201, %s202
      %p211 = scmp.eq.s32.totalorder %s39, 0
      %p212 = por %p210, %p211
      %p213 = scmp.ne.s32.totalorder %s201, %s202
      %p214 = scmp.eq.s32.totalorder %s40, 1
      %p215 = por %p213, %p214
      %p217 = scmp.ne.s32.totalorder %s202, %s216
      %p218 = scmp.eq.s32.totalorder %s40, 0
      %p219 = por %p217, %p218
      %s221 = sadd.s32 %s220, 1
      %p224 = scmp.eq.s32.totalorder %s34, 1
      %p225 = scmp.ne.s32.totalorder %s220, %s222
      %p226 = scmp.eq.s32.totalorder %s34, 0
      %p227 = por %p225, %p226
      %p228 = scmp.ne.s32.totalorder %s220, %s222
      %p229 = scmp.eq.s32.totalorder %s39, 1
      %p230 = por %p228, %p229
      %p231 = scmp.ne.s32.totalorder %s222, %s223
      %p232 = scmp.eq.s32.totalorder %s39, 0
      %p233 = por %p231, %p232
      %p234 = scmp.ne.s32.totalorder %s222, %s223
      %p235 = scmp.eq.s32.totalorder %s40, 1
      %p236 = por %p234, %p235
      %p238 = scmp.ne.s32.totalorder %s223, %s237
      %p239 = scmp.eq.s32.totalorder %s40, 0
      %p240 = por %p238, %p239
      %s242 = sadd.s32 %s241, 1
      %p245 = scmp.eq.s32.totalorder %s34, 1
      %p246 = scmp.ne.s32.totalorder %s241, %s243
      %p247 = scmp.eq.s32.totalorder %s34, 0
      %p248 = por %p246, %p247
      %p249 = scmp.ne.s32.totalorder %s241, %s243
      %p250 = scmp.eq.s32.totalorder %s39, 1
      %p251 = por %p249, %p250
      %p252 = scmp.ne.s32.totalorder %s243, %s244
      %p253 = scmp.eq.s32.totalorder %s39, 0
      %p254 = por %p252, %p253
      %p255 = scmp.ne.s32.totalorder %s243, %s244
      %p256 = scmp.eq.s32.totalorder %s40, 1
      %p257 = por %p255, %p256
      %p259 = scmp.ne.s32.totalorder %s244, %s258
      %p260 = scmp.eq.s32.totalorder %s40, 0
      %p261 = por %p259, %p260
      %s263 = sadd.s32 %s262, 1
      %p266 = scmp.eq.s32.totalorder %s34, 1
      %p267 = scmp.ne.s32.totalorder %s262, %s264
      %p268 = scmp.eq.s32.totalorder %s34, 0
      %p269 = por %p267, %p268
      %p270 = scmp.ne.s32.totalorder %s262, %s264
      %p271 = scmp.eq.s32.totalorder %s39, 1
      %p272 = por %p270, %p271
      %p273 = scmp.ne.s32.totalorder %s264, %s265
      %p274 = scmp.eq.s32.totalorder %s39, 0
      %p275 = por %p273, %p274
      %p276 = scmp.ne.s32.totalorder %s264, %s265
      %p277 = scmp.eq.s32.totalorder %s40, 1
      %p278 = por %p276, %p277
      %p280 = scmp.ne.s32.totalorder %s265, %s279
      %p281 = scmp.eq.s32.totalorder %s40, 0
      %p282 = por %p280, %p281
      %s284 = sadd.s32 %s283, 1
      %p287 = scmp.eq.s32.totalorder %s34, 1
      %p288 = scmp.ne.s32.totalorder %s283, %s285
      %p289 = scmp.eq.s32.totalorder %s34, 0
      %p290 = por %p288, %p289
      %p291 = scmp.ne.s32.totalorder %s283, %s285
      %p292 = scmp.eq.s32.totalorder %s39, 1
      %p293 = por %p291, %p292
      %p294 = scmp.ne.s32.totalorder %s285, %s286
      %p295 = scmp.eq.s32.totalorder %s39, 0
      %p296 = por %p294, %p295
      %p297 = scmp.ne.s32.totalorder %s285, %s286
      %p298 = scmp.eq.s32.totalorder %s40, 1
      %p299 = por %p297, %p298
      %p301 = scmp.ne.s32.totalorder %s286, %s300
      %p302 = scmp.eq.s32.totalorder %s40, 0
      %p303 = por %p301, %p302
      %s304 = ssub.s32 %s34, %s41
      %p305 = scmp.eq.s32.totalorder %s304, 0
      %s307 = sadd.s32 %s306, 1
      %s308 = scalar_select %p305, %s306, %s307
      %p311 = pneg %p305
      %p312 = scmp.eq.s32.totalorder %s34, 1
      %p313 = por %p311, %p312
      %p314 = scmp.ne.s32.totalorder %s306, %s309
      %p315 = scmp.eq.s32.totalorder %s34, 0
      %p316 = por %p314, %p315
      %p317 = scmp.ne.s32.totalorder %s306, %s309
      %p318 = scmp.eq.s32.totalorder %s39, 1
      %p319 = por %p317, %p318
      %p320 = scmp.ne.s32.totalorder %s309, %s310
      %p321 = scmp.eq.s32.totalorder %s39, 0
      %p322 = por %p320, %p321
      %p323 = scmp.ne.s32.totalorder %s309, %s310
      %p324 = scmp.eq.s32.totalorder %s40, 1
      %p325 = por %p323, %p324
      %p327 = scmp.ne.s32.totalorder %s310, %s326
      %p328 = scmp.eq.s32.totalorder %s40, 0
      %p329 = por %p327, %p328
      %s330 = ssub.s32 %s34, %s41
      %p331 = scmp.eq.s32.totalorder %s330, 0
      %s333 = sadd.s32 %s332, 1
      %s334 = scalar_select %p331, %s332, %s333
      %p337 = pneg %p331
      %p338 = scmp.eq.s32.totalorder %s34, 1
      %p339 = por %p337, %p338
      %p340 = scmp.ne.s32.totalorder %s332, %s335
      %p341 = scmp.eq.s32.totalorder %s34, 0
      %p342 = por %p340, %p341
      %p343 = scmp.ne.s32.totalorder %s332, %s335
      %p344 = scmp.eq.s32.totalorder %s39, 1
      %p345 = por %p343, %p344
      %p346 = scmp.ne.s32.totalorder %s335, %s336
      %p347 = scmp.eq.s32.totalorder %s39, 0
      %p348 = por %p346, %p347
      %p349 = scmp.ne.s32.totalorder %s335, %s336
      %p350 = scmp.eq.s32.totalorder %s40, 1
      %p351 = por %p349, %p350
      %p353 = scmp.ne.s32.totalorder %s336, %s352
      %p354 = scmp.eq.s32.totalorder %s40, 0
      %p355 = por %p353, %p354
      %s356 = ssub.s32 %s34, %s41
      %p357 = scmp.eq.s32.totalorder %s356, 0
      %s359 = sadd.s32 %s358, 1
      %s360 = scalar_select %p357, %s358, %s359
      %p363 = pneg %p357
      %p364 = scmp.eq.s32.totalorder %s34, 1
      %p365 = por %p363, %p364
      %p366 = scmp.ne.s32.totalorder %s358, %s361
      %p367 = scmp.eq.s32.totalorder %s34, 0
      %p368 = por %p366, %p367
      %p369 = scmp.ne.s32.totalorder %s358, %s361
      %p370 = scmp.eq.s32.totalorder %s39, 1
      %p371 = por %p369, %p370
      %p372 = scmp.ne.s32.totalorder %s361, %s362
      %p373 = scmp.eq.s32.totalorder %s39, 0
      %p374 = por %p372, %p373
      %p375 = scmp.ne.s32.totalorder %s361, %s362
      %p376 = scmp.eq.s32.totalorder %s40, 1
      %p377 = por %p375, %p376
      %p379 = scmp.ne.s32.totalorder %s362, %s378
      %p380 = scmp.eq.s32.totalorder %s40, 0
      %p381 = por %p379, %p380
      %s382 = ssub.s32 %s34, %s41
      %p383 = scmp.eq.s32.totalorder %s382, 0
      %s385 = sadd.s32 %s384, 1
      %s386 = scalar_select %p383, %s384, %s385
      %p389 = pneg %p383
      %p390 = scmp.eq.s32.totalorder %s34, 1
      %p391 = por %p389, %p390
      %p392 = scmp.ne.s32.totalorder %s384, %s387
      %p393 = scmp.eq.s32.totalorder %s34, 0
      %p394 = por %p392, %p393
      %p395 = scmp.ne.s32.totalorder %s384, %s387
      %p396 = scmp.eq.s32.totalorder %s39, 1
      %p397 = por %p395, %p396
      %p398 = scmp.ne.s32.totalorder %s387, %s388
      %p399 = scmp.eq.s32.totalorder %s39, 0
      %p400 = por %p398, %p399
      %p401 = scmp.ne.s32.totalorder %s387, %s388
      %p402 = scmp.eq.s32.totalorder %s40, 1
      %p403 = por %p401, %p402
      %p405 = scmp.ne.s32.totalorder %s388, %s404
      %p406 = scmp.eq.s32.totalorder %s40, 0
      %p407 = por %p405, %p406
      %s408 = ssub.s32 %s34, %s41
      %p409 = scmp.eq.s32.totalorder %s408, 0
      %s411 = sadd.s32 %s410, 1
      %s412 = scalar_select %p409, %s410, %s411
      %p415 = pneg %p409
      %p416 = scmp.eq.s32.totalorder %s34, 1
      %p417 = por %p415, %p416
      %p418 = scmp.ne.s32.totalorder %s410, %s413
      %p419 = scmp.eq.s32.totalorder %s34, 0
      %p420 = por %p418, %p419
      %p421 = scmp.ne.s32.totalorder %s410, %s413
      %p422 = scmp.eq.s32.totalorder %s39, 1
      %p423 = por %p421, %p422
      %p424 = scmp.ne.s32.totalorder %s413, %s414
      %p425 = scmp.eq.s32.totalorder %s39, 0
      %p426 = por %p424, %p425
      %p427 = scmp.ne.s32.totalorder %s413, %s414
      %p428 = scmp.eq.s32.totalorder %s40, 1
      %p429 = por %p427, %p428
      %p431 = scmp.ne.s32.totalorder %s414, %s430
      %p432 = scmp.eq.s32.totalorder %s40, 0
      %p433 = por %p431, %p432
      %p434 = scmp.le.s32.totalorder 1, %s34
      %p435 = scmp.lt.s32.totalorder %s34, 3
      %p436 = pnand %p434, %p435
      %p437 = pneg %p436
      // Predicated region
      $region9: #{tpu_custom_call.1} parent=5 // pred_check
        _
      $region10: #{tpu_custom_call.1} parent=5 // pred_check_branch
        %439 = sbr.rel (%p436) target = $region12
      $region11: #{tpu_custom_call.1} parent=5 // pred_region
        %s440 = ssub.s32 %s34, 1
        // Predicated region
        $region13: #{tpu_custom_call.1} parent=11 // pred_check
          %p441 = pneg %p107
        $region14: #{tpu_custom_call.1} parent=11 // pred_check_branch
          %443 = sbr.rel (%p441) target = $region16
        $region15: #{tpu_custom_call.1} parent=11 // pred_region
          %445 = vsyncadd [#allocation3], 0
          %s446 = sshll.u32 %s2, 4
          %s447 = int_to_ptr.hbm [resolvable:$true] %s446
          %s448 = sshll.u32 [#allocation2], 4
          %s449 = int_to_ptr.vmem [resolvable:$true] %s448
          %454 = dma.hbm_to_vmem [thread:$0]  %s447, 8192, %s449, [#allocation3], 256, 256, 16
        $region16: #{tpu_custom_call.1} parent=11 // pred_fallthru
          _
        // Predicated region
        $region17: #{tpu_custom_call.1} parent=11 // pred_check
          %p455 = pneg %p128
        $region18: #{tpu_custom_call.1} parent=11 // pred_check_branch
          %457 = sbr.rel (%p455) target = $region20
        $region19: #{tpu_custom_call.1} parent=11 // pred_region
          _
        $region20: #{tpu_custom_call.1} parent=11 // pred_fallthru
          _
        // Predicated region
        $region21: #{tpu_custom_call.1} parent=11 // pred_check
          %p458 = pneg %p149
        $region22: #{tpu_custom_call.1} parent=11 // pred_check_branch
          %460 = sbr.rel (%p458) target = $region24
        $region23: #{tpu_custom_call.1} parent=11 // pred_region
          _
        $region24: #{tpu_custom_call.1} parent=11 // pred_fallthru
          _
        // Predicated region
        $region25: #{tpu_custom_call.1} parent=11 // pred_check
          %p461 = pneg %p170
        $region26: #{tpu_custom_call.1} parent=11 // pred_check_branch
          %463 = sbr.rel (%p461) target = $region28
        $region27: #{tpu_custom_call.1} parent=11 // pred_region
          _
        $region28: #{tpu_custom_call.1} parent=11 // pred_fallthru
          _
        // Predicated region
        $region29: #{tpu_custom_call.1} parent=11 // pred_check
          %p464 = pneg %p191
        $region30: #{tpu_custom_call.1} parent=11 // pred_check_branch
          %466 = sbr.rel (%p464) target = $region32
        $region31: #{tpu_custom_call.1} parent=11 // pred_region
          _
        $region32: #{tpu_custom_call.1} parent=11 // pred_fallthru
          _
        // Predicated region
        $region33: #{tpu_custom_call.1} parent=11 // pred_check
          %p467 = pneg %p212
        $region34: #{tpu_custom_call.1} parent=11 // pred_check_branch
          %469 = sbr.rel (%p467) target = $region36
        $region35: #{tpu_custom_call.1} parent=11 // pred_region
          _
        $region36: #{tpu_custom_call.1} parent=11 // pred_fallthru
          _
        // Predicated region
        $region37: #{tpu_custom_call.1} parent=11 // pred_check
          %p470 = pneg %p233
        $region38: #{tpu_custom_call.1} parent=11 // pred_check_branch
          %472 = sbr.rel (%p470) target = $region40
        $region39: #{tpu_custom_call.1} parent=11 // pred_region
          _
        $region40: #{tpu_custom_call.1} parent=11 // pred_fallthru
          _
        // Predicated region
        $region41: #{tpu_custom_call.1} parent=11 // pred_check
          %p473 = pneg %p254
        $region42: #{tpu_custom_call.1} parent=11 // pred_check_branch
          %475 = sbr.rel (%p473) target = $region44
        $region43: #{tpu_custom_call.1} parent=11 // pred_region
          _
        $region44: #{tpu_custom_call.1} parent=11 // pred_fallthru
          _
        // Predicated region
        $region45: #{tpu_custom_call.1} parent=11 // pred_check
          %p476 = pneg %p275
        $region46: #{tpu_custom_call.1} parent=11 // pred_check_branch
          %478 = sbr.rel (%p476) target = $region48
        $region47: #{tpu_custom_call.1} parent=11 // pred_region
          %480 = vsyncadd [#allocation6], 0
          %s481 = sshll.u32 %s10, 4
          %s482 = int_to_ptr.hbm [resolvable:$true] %s481
          %s483 = sshll.u32 [#allocation5], 4
          %s484 = int_to_ptr.vmem [resolvable:$true] %s483
          %489 = dma.hbm_to_vmem [thread:$0]  %s482, 8192, %s484, [#allocation6], 512, 512, 32
        $region48: #{tpu_custom_call.1} parent=11 // pred_fallthru
          _
        // Predicated region
        $region49: #{tpu_custom_call.1} parent=11 // pred_check
          %p490 = pneg %p296
        $region50: #{tpu_custom_call.1} parent=11 // pred_check_branch
          %492 = sbr.rel (%p490) target = $region52
        $region51: #{tpu_custom_call.1} parent=11 // pred_region
          _
        $region52: #{tpu_custom_call.1} parent=11 // pred_fallthru
          _
      $region12: #{tpu_custom_call.1} parent=5 // pred_fallthru
        _
      %p493 = scmp.lt.s32.totalorder %s34, 2
      // Predicated region
      $region53: #{tpu_custom_call.1} parent=5 // pred_check
        %p494 = pneg %p493
      $region54: #{tpu_custom_call.1} parent=5 // pred_check_branch
        %496 = sbr.rel (%p494) target = $region56
      $region55: #{tpu_custom_call.1} parent=5 // pred_region
        // Predicated region
        $region57: #{tpu_custom_call.1} parent=55 // pred_check
          %p497 = pneg %p54
        $region58: #{tpu_custom_call.1} parent=55 // pred_check_branch
          %499 = sbr.rel (%p497) target = $region60
        $region59: #{tpu_custom_call.1} parent=55 // pred_region
          %p500 = scmp.lt.s32.totalorder %s34, 1
          %s501 = scalar_select %p500, %s34, 1
          %s502 = smul.addr %s501, 2
          %s503 = smul.addr %s502, 8
          %s504 = scalar_lea.vmem %s0, %s503
        $region60: #{tpu_custom_call.1} parent=55 // pred_fallthru
          _
        // Predicated region
        $region61: #{tpu_custom_call.1} parent=55 // pred_check
          %p505 = pneg %p80
        $region62: #{tpu_custom_call.1} parent=55 // pred_check_branch
          %507 = sbr.rel (%p505) target = $region64
        $region63: #{tpu_custom_call.1} parent=55 // pred_region
          %p508 = scmp.lt.s32.totalorder %s34, 1
          %s509 = scalar_select %p508, %s34, 1
          %s510 = smul.addr %s509, 8
          %s511 = scalar_lea.vmem %s1, %s510
        $region64: #{tpu_custom_call.1} parent=55 // pred_fallthru
          _
      $region56: #{tpu_custom_call.1} parent=5 // pred_fallthru
        _
      %p512 = scmp.le.s32.totalorder 1, %s34
      %p513 = scmp.lt.s32.totalorder %s34, 3
      %p514 = pnand %p512, %p513
      %p515 = pneg %p514
      // Predicated region
      $region65: #{tpu_custom_call.1} parent=5 // pred_check
        _
      $region66: #{tpu_custom_call.1} parent=5 // pred_check_branch
        %517 = sbr.rel (%p514) target = $region68
      $region67: #{tpu_custom_call.1} parent=5 // pred_region
        %s518 = ssub.s32 %s34, 1
        // Predicated region
        $region69: #{tpu_custom_call.1} parent=67 // pred_check
          %p519 = pneg %p107
        $region70: #{tpu_custom_call.1} parent=67 // pred_check_branch
          %521 = sbr.rel (%p519) target = $region72
        $region71: #{tpu_custom_call.1} parent=67 // pred_region
          %523 = dma.done [#allocation3], 8192
        $region72: #{tpu_custom_call.1} parent=67 // pred_fallthru
          _
        // Predicated region
        $region73: #{tpu_custom_call.1} parent=67 // pred_check
          %p524 = pneg %p275
        $region74: #{tpu_custom_call.1} parent=67 // pred_check_branch
          %526 = sbr.rel (%p524) target = $region76
        $region75: #{tpu_custom_call.1} parent=67 // pred_region
          %528 = dma.done [#allocation6], 8192
        $region76: #{tpu_custom_call.1} parent=67 // pred_fallthru
          _
        %p529 = scmp.lt.s32.totalorder %s39, 1
        %s530 = scalar_select %p529, %s39, 1
        %s531 = smul.addr %s530, 2
        %s532 = smul.addr %s531, 8
        %s533 = scalar_lea.vmem %s0, %s532
        %p534 = pneg %p60
        %p535 = pneg %p57
        %p536 = scmp.lt.s32.totalorder %s39, 1
        %s537 = scalar_select %p536, %s39, 1
        %s538 = smul.addr %s537, 8
        %s539 = scalar_lea.vmem %s1, %s538
        %p540 = pneg %p86
        %p541 = pneg %p83
        %p542 = pneg %p107
        %p543 = pneg %p104
        %p544 = pneg %p128
        %p545 = pneg %p125
        %p546 = pneg %p149
        %p547 = pneg %p146
        %p548 = pneg %p170
        %p549 = pneg %p167
        %p550 = pneg %p191
        %p551 = pneg %p188
        %p552 = pneg %p212
        %p553 = pneg %p209
        %p554 = pneg %p233
        %p555 = pneg %p230
        %p556 = pneg %p254
        %p557 = pneg %p251
        %p558 = pneg %p275
        %p559 = pneg %p272
        %p560 = pneg %p296
        %p561 = pneg %p293
        %p562 = pneg %p322
        %p563 = pneg %p319
        %s564 = sand.u32 %s309, 1
        %s565 = scalar_lea.sflag [#allocation4], %s564
        %s566 = sand.u32 %s309, 1
        %s567 = smul.addr %s566, 16
        %s568 = scalar_lea.vmem [#allocation7], %s567
        %p569 = pneg %p348
        %p570 = pneg %p345
        %s571 = sand.u32 %s39, 1
        %s572 = scalar_lea.sflag [#allocation9], %s571
        %s573 = sand.u32 %s335, 1
        %s574 = smul.addr %s573, 16
        %s575 = scalar_lea.vmem [#allocation8], %s574
        %p576 = pneg %p374
        %p577 = pneg %p371
        %s578 = sand.u32 %s39, 1
        %s579 = scalar_lea.sflag [#allocation9], %s578
        %s580 = sand.u32 %s361, 1
        %s581 = smul.addr %s580, 16
        %s582 = scalar_lea.vmem [#allocation10], %s581
        %p583 = pneg %p400
        %p584 = pneg %p397
        %s585 = sand.u32 %s39, 1
        %s586 = scalar_lea.sflag [#allocation12], %s585
        %s587 = sand.u32 %s387, 1
        %s588 = smul.addr %s587, 8
        %s589 = scalar_lea.vmem [#allocation11], %s588
        %p590 = pneg %p426
        %p591 = pneg %p423
        %s592 = sand.u32 %s39, 1
        %s593 = scalar_lea.sflag [#allocation12], %s592
        %s594 = sand.u32 %s413, 1
        %s595 = smul.addr %s594, 8
        %s596 = scalar_lea.vmem [#allocation13], %s595
        %p597 = scmp.lt.s32.totalorder %s39, 1
        %s598 = scalar_select %p597, %s39, 1
        %s599 = smul.addr %s598, 2
        %s600 = smul.addr %s599, 8
        %s601 = scalar_lea.vmem %s0, %s600
        %p602 = scmp.lt.s32.totalorder %s39, 1
        %s603 = scalar_select %p602, %s39, 1
        %s604 = smul.addr %s603, 8
        %s605 = scalar_lea.vmem %s1, %s604
        %v606 = vld [vmem:[%s601] sm:$0xff]
        %v607 = vld [vmem:[%s601 + $0x8] sm:$0xff]
        %v608 = vadd.f32 %v606, %v607
        %609 = vadd.xlane.f32.xlu0 %v608
        %v610 = vpop.xlane.xlu0 %609
        %v611 = vlog2.pop %v610
        %v612 = vmul.f32 %v611, 0.6931472
        %v613 = vadd.f32 %v606, 1.0
        %v614 = vlog2.pop %v613
        %v615 = vmul.f32 %v614, 0.6931472
        %v616 = vmul.f32 -0.5, %v606
        %v617 = vadd.f32 %v616, 1.0
        %v618 = vmul.f32 %v617, %v606
        %v619 = vand.u32 2147483647, %v606
        %vm620 = vcmp.lt.f32.partialorder %v619, 0.0004427343
        %v621 = vsel %vm620, %v618, %v615
        %v622 = vadd.f32 %v607, 1.0
        %v623 = vlog2.pop %v622
        %v624 = vmul.f32 %v623, 0.6931472
        %v625 = vmul.f32 -0.5, %v607
        %v626 = vadd.f32 %v625, 1.0
        %v627 = vmul.f32 %v626, %v607
        %v628 = vand.u32 2147483647, %v607
        %vm629 = vcmp.lt.f32.partialorder %v628, 0.0004427343
        %v630 = vsel %vm629, %v627, %v624
        %v631 = vld [vmem:[#allocation2] sm:$0xff]
        %v632 = vld [vmem:[#allocation2 + $0x8] sm:$0xff]
        %v633 = vld [vmem:[#allocation2 + $0x10] sm:$0xff]
        %v634 = vld [vmem:[#allocation2 + $0x18] sm:$0xff]
        %v635 = vld [vmem:[#allocation2 + $0x20] sm:$0xff]
        %v636 = vld [vmem:[#allocation2 + $0x28] sm:$0xff]
        %v637 = vld [vmem:[#allocation2 + $0x30] sm:$0xff]
        %v638 = vld [vmem:[#allocation2 + $0x38] sm:$0xff]
        %v639 = vld [vmem:[#allocation2 + $0x40] sm:$0xff]
        %v640 = vld [vmem:[#allocation2 + $0x48] sm:$0xff]
        %v641 = vld [vmem:[#allocation2 + $0x50] sm:$0xff]
        %v642 = vld [vmem:[#allocation2 + $0x58] sm:$0xff]
        %v643 = vld [vmem:[#allocation2 + $0x60] sm:$0xff]
        %v644 = vld [vmem:[#allocation2 + $0x68] sm:$0xff]
        %v645 = vld [vmem:[#allocation2 + $0x70] sm:$0xff]
        %v646 = vld [vmem:[#allocation2 + $0x78] sm:$0xff]
        %v647 = vld [vmem:[#allocation2 + $0x80] sm:$0xff]
        %v648 = vld [vmem:[#allocation2 + $0x88] sm:$0xff]
        %v649 = vld [vmem:[#allocation2 + $0x90] sm:$0xff]
        %v650 = vld [vmem:[#allocation2 + $0x98] sm:$0xff]
        %v651 = vld [vmem:[#allocation2 + $0xa0] sm:$0xff]
        %v652 = vld [vmem:[#allocation2 + $0xa8] sm:$0xff]
        %v653 = vld [vmem:[#allocation2 + $0xb0] sm:$0xff]
        %v654 = vld [vmem:[#allocation2 + $0xb8] sm:$0xff]
        %v655 = vld [vmem:[#allocation2 + $0xc0] sm:$0xff]
        %v656 = vld [vmem:[#allocation2 + $0xc8] sm:$0xff]
        %v657 = vld [vmem:[#allocation2 + $0xd0] sm:$0xff]
        %v658 = vld [vmem:[#allocation2 + $0xd8] sm:$0xff]
        %v659 = vld [vmem:[#allocation2 + $0xe0] sm:$0xff]
        %v660 = vld [vmem:[#allocation2 + $0xe8] sm:$0xff]
        %v661 = vld [vmem:[#allocation2 + $0xf0] sm:$0xff]
        %v662 = vld [vmem:[#allocation2 + $0xf8] sm:$0xff]
        %v663 = vld [vmem:[#allocation2 + $0x100] sm:$0xff]
        %v664 = vld [vmem:[#allocation2 + $0x108] sm:$0xff]
        %v665 = vld [vmem:[#allocation2 + $0x110] sm:$0xff]
        %v666 = vld [vmem:[#allocation2 + $0x118] sm:$0xff]
        %v667 = vld [vmem:[#allocation2 + $0x120] sm:$0xff]
        %v668 = vld [vmem:[#allocation2 + $0x128] sm:$0xff]
        %v669 = vld [vmem:[#allocation2 + $0x130] sm:$0xff]
        %v670 = vld [vmem:[#allocation2 + $0x138] sm:$0xff]
        %v671 = vld [vmem:[#allocation2 + $0x140] sm:$0xff]
        %v672 = vld [vmem:[#allocation2 + $0x148] sm:$0xff]
        %v673 = vld [vmem:[#allocation2 + $0x150] sm:$0xff]
        %v674 = vld [vmem:[#allocation2 + $0x158] sm:$0xff]
        %v675 = vld [vmem:[#allocation2 + $0x160] sm:$0xff]
        %v676 = vld [vmem:[#allocation2 + $0x168] sm:$0xff]
        %v677 = vld [vmem:[#allocation2 + $0x170] sm:$0xff]
        %v678 = vld [vmem:[#allocation2 + $0x178] sm:$0xff]
        %v679 = vld [vmem:[#allocation2 + $0x180] sm:$0xff]
        %v680 = vld [vmem:[#allocation2 + $0x188] sm:$0xff]
        %v681 = vld [vmem:[#allocation2 + $0x190] sm:$0xff]
        %v682 = vld [vmem:[#allocation2 + $0x198] sm:$0xff]
        %v683 = vld [vmem:[#allocation2 + $0x1a0] sm:$0xff]
        %v684 = vld [vmem:[#allocation2 + $0x1a8] sm:$0xff]
        %v685 = vld [vmem:[#allocation2 + $0x1b0] sm:$0xff]
        %v686 = vld [vmem:[#allocation2 + $0x1b8] sm:$0xff]
        %v687 = vld [vmem:[#allocation2 + $0x1c0] sm:$0xff]
        %v688 = vld [vmem:[#allocation2 + $0x1c8] sm:$0xff]
        %v689 = vld [vmem:[#allocation2 + $0x1d0] sm:$0xff]
        %v690 = vld [vmem:[#allocation2 + $0x1d8] sm:$0xff]
        %v691 = vld [vmem:[#allocation2 + $0x1e0] sm:$0xff]
        %v692 = vld [vmem:[#allocation2 + $0x1e8] sm:$0xff]
        %v693 = vld [vmem:[#allocation2 + $0x1f0] sm:$0xff]
        %v694 = vld [vmem:[#allocation2 + $0x1f8] sm:$0xff]
        %v695 = vld [vmem:[%s3] sm:$0x3]
        %v697 = vperm.slane %v695, 0
        %v698 = vperm.slane %v695, 1
        %701 = vmatpush.msra.mxu0 %v661
        %702 = vmatpush.msra.mxu0 %v659
        %703 = vmatpush.msra.mxu0 %v657
        %704 = vmatpush.msra.mxu0 %v655
        %705 = vmatpush.msra.mxu0 %v653
        %706 = vmatpush.msra.mxu0 %v651
        %707 = vmatpush.msra.mxu0 %v649
        %708 = vmatpush.msra.mxu0 %v647
        %709 = vmatpush.msra.mxu0 %v645
        %710 = vmatpush.msra.mxu0 %v643
        %711 = vmatpush.msra.mxu0 %v641
        %712 = vmatpush.msra.mxu0 %v639
        %713 = vmatpush.msra.mxu0 %v637
        %714 = vmatpush.msra.mxu0 %v635
        %715 = vmatpush.msra.mxu0 %v633
        %716 = vmatpush.msra.mxu0 %v631
        %717 = vmatmul.f32.gmra.mxu0 %v621
        %v718 = vpop.f32.mrf.mxu0
        %v719 = vadd.f32 %v697, %v718
        %720 = vdwg.mxu0
        %721 = vmatpush.msra.mxu0 %v693
        %722 = vmatpush.msra.mxu0 %v691
        %723 = vmatpush.msra.mxu0 %v689
        %724 = vmatpush.msra.mxu0 %v687
        %725 = vmatpush.msra.mxu0 %v685
        %726 = vmatpush.msra.mxu0 %v683
        %727 = vmatpush.msra.mxu0 %v681
        %728 = vmatpush.msra.mxu0 %v679
        %729 = vmatpush.msra.mxu0 %v677
        %730 = vmatpush.msra.mxu0 %v675
        %731 = vmatpush.msra.mxu0 %v673
        %732 = vmatpush.msra.mxu0 %v671
        %733 = vmatpush.msra.mxu0 %v669
        %734 = vmatpush.msra.mxu0 %v667
        %735 = vmatpush.msra.mxu0 %v665
        %736 = vmatpush.msra.mxu0 %v663
        %737 = vmatmul.f32.gmra.mxu0 %v630
        %v738 = vpop.f32.mrf.mxu0
        %v739 = vadd.f32 %v719, %v738
        %740 = vdwg.mxu0
        %741 = vmatpush.msra.mxu0 %v662
        %742 = vmatpush.msra.mxu0 %v660
        %743 = vmatpush.msra.mxu0 %v658
        %744 = vmatpush.msra.mxu0 %v656
        %745 = vmatpush.msra.mxu0 %v654
        %746 = vmatpush.msra.mxu0 %v652
        %747 = vmatpush.msra.mxu0 %v650
        %748 = vmatpush.msra.mxu0 %v648
        %749 = vmatpush.msra.mxu0 %v646
        %750 = vmatpush.msra.mxu0 %v644
        %751 = vmatpush.msra.mxu0 %v642
        %752 = vmatpush.msra.mxu0 %v640
        %753 = vmatpush.msra.mxu0 %v638
        %754 = vmatpush.msra.mxu0 %v636
        %755 = vmatpush.msra.mxu0 %v634
        %756 = vmatpush.msra.mxu0 %v632
        %757 = vmatmul.f32.gmra.mxu0 %v621
        %v758 = vpop.f32.mrf.mxu0
        %v759 = vadd.f32 %v698, %v758
        %760 = vdwg.mxu0
        %761 = vmatpush.msra.mxu0 %v694
        %762 = vmatpush.msra.mxu0 %v692
        %763 = vmatpush.msra.mxu0 %v690
        %764 = vmatpush.msra.mxu0 %v688
        %765 = vmatpush.msra.mxu0 %v686
        %766 = vmatpush.msra.mxu0 %v684
        %767 = vmatpush.msra.mxu0 %v682
        %768 = vmatpush.msra.mxu0 %v680
        %769 = vmatpush.msra.mxu0 %v678
        %770 = vmatpush.msra.mxu0 %v676
        %771 = vmatpush.msra.mxu0 %v674
        %772 = vmatpush.msra.mxu0 %v672
        %773 = vmatpush.msra.mxu0 %v670
        %774 = vmatpush.msra.mxu0 %v668
        %775 = vmatpush.msra.mxu0 %v666
        %776 = vmatpush.msra.mxu0 %v664
        %777 = vmatmul.f32.gmra.mxu0 %v630
        %v778 = vpop.f32.mrf.mxu0
        %v779 = vadd.f32 %v759, %v778
        %780 = vdwg.mxu0
        %v781 = vmax.f32 %v739, 0.0
        %v782 = vmax.f32 %v779, 0.0
        %v783 = vld [vmem:[%s4] sm:$0xff]
        %v784 = vld [vmem:[%s4 + $0x8] sm:$0xff]
        %v785 = vld [vmem:[%s4 + $0x10] sm:$0xff]
        %v786 = vld [vmem:[%s4 + $0x18] sm:$0xff]
        %v787 = vld [vmem:[%s4 + $0x20] sm:$0xff]
        %v788 = vld [vmem:[%s4 + $0x28] sm:$0xff]
        %v789 = vld [vmem:[%s4 + $0x30] sm:$0xff]
        %v790 = vld [vmem:[%s4 + $0x38] sm:$0xff]
        %v791 = vld [vmem:[%s4 + $0x40] sm:$0xff]
        %v792 = vld [vmem:[%s4 + $0x48] sm:$0xff]
        %v793 = vld [vmem:[%s4 + $0x50] sm:$0xff]
        %v794 = vld [vmem:[%s4 + $0x58] sm:$0xff]
        %v795 = vld [vmem:[%s4 + $0x60] sm:$0xff]
        %v796 = vld [vmem:[%s4 + $0x68] sm:$0xff]
        %v797 = vld [vmem:[%s4 + $0x70] sm:$0xff]
        %v798 = vld [vmem:[%s4 + $0x78] sm:$0xff]
        %v799 = vld [vmem:[%s4 + $0x80] sm:$0xff]
        %v800 = vld [vmem:[%s4 + $0x88] sm:$0xff]
        %v801 = vld [vmem:[%s4 + $0x90] sm:$0xff]
        %v802 = vld [vmem:[%s4 + $0x98] sm:$0xff]
        %v803 = vld [vmem:[%s4 + $0xa0] sm:$0xff]
        %v804 = vld [vmem:[%s4 + $0xa8] sm:$0xff]
        %v805 = vld [vmem:[%s4 + $0xb0] sm:$0xff]
        %v806 = vld [vmem:[%s4 + $0xb8] sm:$0xff]
        %v807 = vld [vmem:[%s4 + $0xc0] sm:$0xff]
        %v808 = vld [vmem:[%s4 + $0xc8] sm:$0xff]
        %v809 = vld [vmem:[%s4 + $0xd0] sm:$0xff]
        %v810 = vld [vmem:[%s4 + $0xd8] sm:$0xff]
        %v811 = vld [vmem:[%s4 + $0xe0] sm:$0xff]
        %v812 = vld [vmem:[%s4 + $0xe8] sm:$0xff]
        %v813 = vld [vmem:[%s4 + $0xf0] sm:$0xff]
        %v814 = vld [vmem:[%s4 + $0xf8] sm:$0xff]
        %v815 = vld [vmem:[%s5] sm:$0x1]
        %v817 = vperm.slane %v815, 0
        %819 = vmatpush.msra.mxu0 %v798
        %820 = vmatpush.msra.mxu0 %v797
        %821 = vmatpush.msra.mxu0 %v796
        %822 = vmatpush.msra.mxu0 %v795
        %823 = vmatpush.msra.mxu0 %v794
        %824 = vmatpush.msra.mxu0 %v793
        %825 = vmatpush.msra.mxu0 %v792
        %826 = vmatpush.msra.mxu0 %v791
        %827 = vmatpush.msra.mxu0 %v790
        %828 = vmatpush.msra.mxu0 %v789
        %829 = vmatpush.msra.mxu0 %v788
        %830 = vmatpush.msra.mxu0 %v787
        %831 = vmatpush.msra.mxu0 %v786
        %832 = vmatpush.msra.mxu0 %v785
        %833 = vmatpush.msra.mxu0 %v784
        %834 = vmatpush.msra.mxu0 %v783
        %835 = vmatmul.f32.gmra.mxu0 %v781
        %v836 = vpop.f32.mrf.mxu0
        %v837 = vadd.f32 %v817, %v836
        %838 = vdwg.mxu0
        %839 = vmatpush.msra.mxu0 %v814
        %840 = vmatpush.msra.mxu0 %v813
        %841 = vmatpush.msra.mxu0 %v812
        %842 = vmatpush.msra.mxu0 %v811
        %843 = vmatpush.msra.mxu0 %v810
        %844 = vmatpush.msra.mxu0 %v809
        %845 = vmatpush.msra.mxu0 %v808
        %846 = vmatpush.msra.mxu0 %v807
        %847 = vmatpush.msra.mxu0 %v806
        %848 = vmatpush.msra.mxu0 %v805
        %849 = vmatpush.msra.mxu0 %v804
        %850 = vmatpush.msra.mxu0 %v803
        %851 = vmatpush.msra.mxu0 %v802
        %852 = vmatpush.msra.mxu0 %v801
        %853 = vmatpush.msra.mxu0 %v800
        %854 = vmatpush.msra.mxu0 %v799
        %855 = vmatmul.f32.gmra.mxu0 %v782
        %v856 = vpop.f32.mrf.mxu0
        %v857 = vadd.f32 %v837, %v856
        %858 = vdwg.mxu0
        %v859 = vmul.f32 %v857, 1.442695
        %v860 = vpow.pop %v859
        %v861 = vadd.f32 %v860, 0.0001
        %v862 = vrsqrt.pop %v861
        %v863 = vmul.f32 %v862, %v861
        %v864 = vmul.f32 %v863, %v862
        %v865 = vmul.f32 0.5, %v864
        %v866 = vsub.f32 1.5, %v865
        %v867 = vmul.f32 %v862, %v866
        %v868 = vmul.f32 %v861, %v867
        %vm869 = vcmp.eq.f32.partialorder %v861, inf
        %v870 = vsel %vm869, %v861, %v868
        %vm871 = vcmp.eq.f32.partialorder %v861, 0.0
        %v872 = vand.u32 %v861, 2147483648
        %v873 = vsel %vm871, %v872, %v870
        %v874 = vld [vmem:[%s605] sm:$0xff]
        %876 = vrot.lane.b32.xlu0 %v874, 16
        %v877 = vpop.permute.xlu0 %876
        %v879 = vmul.f32 %v873, %v877
        %881 = vrot.lane.b32.xlu0 %v879, 112
        %v882 = vpop.permute.xlu0 %881
        %v884 = vadd.f32 %v857, %v882
        %v885 = vld [vmem:[%s6] sm:$0xff]
        %v886 = vld [vmem:[%s6 + $0x8] sm:$0xff]
        %v887 = vld [vmem:[%s7] sm:$0x1]
        %v889 = vperm.slane %v887, 0
        %vm891 = vcmask 130048
        %v893 = vsel %vm891, %v857, 0
        %895 = vmatpush.msra.mxu0 0.0
        %896 = vmatpush.msra.mxu0 0.0
        %897 = vmatpush.msra.mxu0 0.0
        %898 = vmatpush.msra.mxu0 0.0
        %899 = vmatpush.msra.mxu0 0.0
        %900 = vmatpush.msra.mxu0 0.0
        %901 = vmatpush.msra.mxu0 0.0
        %902 = vmatpush.msra.mxu0 0.0
        %903 = vmatpush.msra.mxu0 0.0
        %904 = vmatpush.msra.mxu0 0.0
        %905 = vmatpush.msra.mxu0 0.0
        %906 = vmatpush.msra.mxu0 0.0
        %907 = vmatpush.msra.mxu0 0.0
        %908 = vmatpush.msra.mxu0 0.0
        %909 = vmatpush.msra.mxu0 %v886
        %910 = vmatpush.msra.mxu0 %v885
        %911 = vmatmul.f32.gmra.mxu0 %v893
        %v912 = vpop.f32.mrf.mxu0
        %v913 = vadd.f32 %v889, %v912
        %914 = vdwg.mxu0
        %v915 = vmax.f32 %v913, 0.0
        %v916 = vld [vmem:[%s8] sm:$0xff]
        %v917 = vld [vmem:[%s8 + $0x8] sm:$0xff]
        %v918 = vld [vmem:[%s9] sm:$0x1]
        %v920 = vperm.slane %v918, 0
        %v923 = vsel %vm891, %v884, 0
        %925 = vmatpush.msra.mxu0 0.0
        %926 = vmatpush.msra.mxu0 0.0
        %927 = vmatpush.msra.mxu0 0.0
        %928 = vmatpush.msra.mxu0 0.0
        %929 = vmatpush.msra.mxu0 0.0
        %930 = vmatpush.msra.mxu0 0.0
        %931 = vmatpush.msra.mxu0 0.0
        %932 = vmatpush.msra.mxu0 0.0
        %933 = vmatpush.msra.mxu0 0.0
        %934 = vmatpush.msra.mxu0 0.0
        %935 = vmatpush.msra.mxu0 0.0
        %936 = vmatpush.msra.mxu0 0.0
        %937 = vmatpush.msra.mxu0 0.0
        %938 = vmatpush.msra.mxu0 0.0
        %939 = vmatpush.msra.mxu0 %v917
        %940 = vmatpush.msra.mxu0 %v916
        %941 = vmatmul.f32.gmra.mxu0 %v923
        %v942 = vpop.f32.mrf.mxu0
        %v943 = vadd.f32 %v920, %v942
        %944 = vdwg.mxu0
        %v945 = vmax.f32 %v943, 0.0
        %v946 = vld [vmem:[#allocation5] sm:$0xff]
        %v947 = vld [vmem:[#allocation5 + $0x8] sm:$0xff]
        %v948 = vld [vmem:[#allocation5 + $0x10] sm:$0xff]
        %v949 = vld [vmem:[#allocation5 + $0x18] sm:$0xff]
        %v950 = vld [vmem:[#allocation5 + $0x20] sm:$0xff]
        %v951 = vld [vmem:[#allocation5 + $0x28] sm:$0xff]
        %v952 = vld [vmem:[#allocation5 + $0x30] sm:$0xff]
        %v953 = vld [vmem:[#allocation5 + $0x38] sm:$0xff]
        %v954 = vld [vmem:[#allocation5 + $0x40] sm:$0xff]
        %v955 = vld [vmem:[#allocation5 + $0x48] sm:$0xff]
        %v956 = vld [vmem:[#allocation5 + $0x50] sm:$0xff]
        %v957 = vld [vmem:[#allocation5 + $0x58] sm:$0xff]
        %v958 = vld [vmem:[#allocation5 + $0x60] sm:$0xff]
        %v959 = vld [vmem:[#allocation5 + $0x68] sm:$0xff]
        %v960 = vld [vmem:[#allocation5 + $0x70] sm:$0xff]
        %v961 = vld [vmem:[#allocation5 + $0x78] sm:$0xff]
        %v962 = vld [vmem:[#allocation5 + $0x80] sm:$0xff]
        %v963 = vld [vmem:[#allocation5 + $0x88] sm:$0xff]
        %v964 = vld [vmem:[#allocation5 + $0x90] sm:$0xff]
        %v965 = vld [vmem:[#allocation5 + $0x98] sm:$0xff]
        %v966 = vld [vmem:[#allocation5 + $0xa0] sm:$0xff]
        %v967 = vld [vmem:[#allocation5 + $0xa8] sm:$0xff]
        %v968 = vld [vmem:[#allocation5 + $0xb0] sm:$0xff]
        %v969 = vld [vmem:[#allocation5 + $0xb8] sm:$0xff]
        %v970 = vld [vmem:[#allocation5 + $0xc0] sm:$0xff]
        %v971 = vld [vmem:[#allocation5 + $0xc8] sm:$0xff]
        %v972 = vld [vmem:[#allocation5 + $0xd0] sm:$0xff]
        %v973 = vld [vmem:[#allocation5 + $0xd8] sm:$0xff]
        %v974 = vld [vmem:[#allocation5 + $0xe0] sm:$0xff]
        %v975 = vld [vmem:[#allocation5 + $0xe8] sm:$0xff]
        %v976 = vld [vmem:[#allocation5 + $0xf0] sm:$0xff]
        %v977 = vld [vmem:[#allocation5 + $0xf8] sm:$0xff]
        %v978 = vld [vmem:[#allocation5 + $0x100] sm:$0xff]
        %v979 = vld [vmem:[#allocation5 + $0x108] sm:$0xff]
        %v980 = vld [vmem:[#allocation5 + $0x110] sm:$0xff]
        %v981 = vld [vmem:[#allocation5 + $0x118] sm:$0xff]
        %v982 = vld [vmem:[#allocation5 + $0x120] sm:$0xff]
        %v983 = vld [vmem:[#allocation5 + $0x128] sm:$0xff]
        %v984 = vld [vmem:[#allocation5 + $0x130] sm:$0xff]
        %v985 = vld [vmem:[#allocation5 + $0x138] sm:$0xff]
        %v986 = vld [vmem:[#allocation5 + $0x140] sm:$0xff]
        %v987 = vld [vmem:[#allocation5 + $0x148] sm:$0xff]
        %v988 = vld [vmem:[#allocation5 + $0x150] sm:$0xff]
        %v989 = vld [vmem:[#allocation5 + $0x158] sm:$0xff]
        %v990 = vld [vmem:[#allocation5 + $0x160] sm:$0xff]
        %v991 = vld [vmem:[#allocation5 + $0x168] sm:$0xff]
        %v992 = vld [vmem:[#allocation5 + $0x170] sm:$0xff]
        %v993 = vld [vmem:[#allocation5 + $0x178] sm:$0xff]
        %v994 = vld [vmem:[#allocation5 + $0x180] sm:$0xff]
        %v995 = vld [vmem:[#allocation5 + $0x188] sm:$0xff]
        %v996 = vld [vmem:[#allocation5 + $0x190] sm:$0xff]
        %v997 = vld [vmem:[#allocation5 + $0x198] sm:$0xff]
        %v998 = vld [vmem:[#allocation5 + $0x1a0] sm:$0xff]
        %v999 = vld [vmem:[#allocation5 + $0x1a8] sm:$0xff]
        %v1000 = vld [vmem:[#allocation5 + $0x1b0] sm:$0xff]
        %v1001 = vld [vmem:[#allocation5 + $0x1b8] sm:$0xff]
        %v1002 = vld [vmem:[#allocation5 + $0x1c0] sm:$0xff]
        %v1003 = vld [vmem:[#allocation5 + $0x1c8] sm:$0xff]
        %v1004 = vld [vmem:[#allocation5 + $0x1d0] sm:$0xff]
        %v1005 = vld [vmem:[#allocation5 + $0x1d8] sm:$0xff]
        %v1006 = vld [vmem:[#allocation5 + $0x1e0] sm:$0xff]
        %v1007 = vld [vmem:[#allocation5 + $0x1e8] sm:$0xff]
        %v1008 = vld [vmem:[#allocation5 + $0x1f0] sm:$0xff]
        %v1009 = vld [vmem:[#allocation5 + $0x1f8] sm:$0xff]
        %v1010 = vld [vmem:[%s11] sm:$0xf]
        %v1012 = vperm.slane %v1010, 0
        %v1013 = vperm.slane %v1010, 1
        %v1014 = vperm.slane %v1010, 2
        %v1015 = vperm.slane %v1010, 3
        %1020 = vmatpush.msra.mxu0 %v1006
        %1021 = vmatpush.msra.mxu0 %v1002
        %1022 = vmatpush.msra.mxu0 %v998
        %1023 = vmatpush.msra.mxu0 %v994
        %1024 = vmatpush.msra.mxu0 %v990
        %1025 = vmatpush.msra.mxu0 %v986
        %1026 = vmatpush.msra.mxu0 %v982
        %1027 = vmatpush.msra.mxu0 %v978
        %1028 = vmatpush.msra.mxu0 %v974
        %1029 = vmatpush.msra.mxu0 %v970
        %1030 = vmatpush.msra.mxu0 %v966
        %1031 = vmatpush.msra.mxu0 %v962
        %1032 = vmatpush.msra.mxu0 %v958
        %1033 = vmatpush.msra.mxu0 %v954
        %1034 = vmatpush.msra.mxu0 %v950
        %1035 = vmatpush.msra.mxu0 %v946
        %1036 = vmatmul.f32.gmra.mxu0 %v945
        %v1037 = vpop.f32.mrf.mxu0
        %v1038 = vadd.f32 %v1012, %v1037
        %1039 = vdwg.mxu0
        %1040 = vmatpush.msra.mxu0 %v1007
        %1041 = vmatpush.msra.mxu0 %v1003
        %1042 = vmatpush.msra.mxu0 %v999
        %1043 = vmatpush.msra.mxu0 %v995
        %1044 = vmatpush.msra.mxu0 %v991
        %1045 = vmatpush.msra.mxu0 %v987
        %1046 = vmatpush.msra.mxu0 %v983
        %1047 = vmatpush.msra.mxu0 %v979
        %1048 = vmatpush.msra.mxu0 %v975
        %1049 = vmatpush.msra.mxu0 %v971
        %1050 = vmatpush.msra.mxu0 %v967
        %1051 = vmatpush.msra.mxu0 %v963
        %1052 = vmatpush.msra.mxu0 %v959
        %1053 = vmatpush.msra.mxu0 %v955
        %1054 = vmatpush.msra.mxu0 %v951
        %1055 = vmatpush.msra.mxu0 %v947
        %1056 = vmatmul.f32.gmra.mxu0 %v945
        %v1057 = vpop.f32.mrf.mxu0
        %v1058 = vadd.f32 %v1013, %v1057
        %1059 = vdwg.mxu0
        %1060 = vmatpush.msra.mxu0 %v1008
        %1061 = vmatpush.msra.mxu0 %v1004
        %1062 = vmatpush.msra.mxu0 %v1000
        %1063 = vmatpush.msra.mxu0 %v996
        %1064 = vmatpush.msra.mxu0 %v992
        %1065 = vmatpush.msra.mxu0 %v988
        %1066 = vmatpush.msra.mxu0 %v984
        %1067 = vmatpush.msra.mxu0 %v980
        %1068 = vmatpush.msra.mxu0 %v976
        %1069 = vmatpush.msra.mxu0 %v972
        %1070 = vmatpush.msra.mxu0 %v968
        %1071 = vmatpush.msra.mxu0 %v964
        %1072 = vmatpush.msra.mxu0 %v960
        %1073 = vmatpush.msra.mxu0 %v956
        %1074 = vmatpush.msra.mxu0 %v952
        %1075 = vmatpush.msra.mxu0 %v948
        %1076 = vmatmul.f32.gmra.mxu0 %v945
        %v1077 = vpop.f32.mrf.mxu0
        %v1078 = vadd.f32 %v1014, %v1077
        %1079 = vdwg.mxu0
        %1080 = vmatpush.msra.mxu0 %v1009
        %1081 = vmatpush.msra.mxu0 %v1005
        %1082 = vmatpush.msra.mxu0 %v1001
        %1083 = vmatpush.msra.mxu0 %v997
        %1084 = vmatpush.msra.mxu0 %v993
        %1085 = vmatpush.msra.mxu0 %v989
        %1086 = vmatpush.msra.mxu0 %v985
        %1087 = vmatpush.msra.mxu0 %v981
        %1088 = vmatpush.msra.mxu0 %v977
        %1089 = vmatpush.msra.mxu0 %v973
        %1090 = vmatpush.msra.mxu0 %v969
        %1091 = vmatpush.msra.mxu0 %v965
        %1092 = vmatpush.msra.mxu0 %v961
        %1093 = vmatpush.msra.mxu0 %v957
        %1094 = vmatpush.msra.mxu0 %v953
        %1095 = vmatpush.msra.mxu0 %v949
        %1096 = vmatmul.f32.gmra.mxu0 %v945
        %v1097 = vpop.f32.mrf.mxu0
        %v1098 = vadd.f32 %v1015, %v1097
        %1099 = vdwg.mxu0
        %v1100 = vmax.f32 %v1038, %v1058
        %1101 = vmax.xlane.f32.xlu0 %v1100
        %v1102 = vpop.xlane.xlu0 %1101
        %v1103 = vsub.f32 %v1038, %v1102
        %v1104 = vsub.f32 %v1058, %v1102
        %v1105 = vmul.f32 %v1103, 1.442695
        %v1106 = vpow.pop %v1105
        %v1107 = vmul.f32 %v1104, 1.442695
        %v1108 = vpow.pop %v1107
        %v1109 = vadd.f32 %v1106, %v1108
        %1110 = vadd.xlane.f32.xlu0 %v1109
        %v1111 = vpop.xlane.xlu0 %1110
        %v1112 = vrcp.pop %v1111
        %v1113 = vmul.f32 %v1111, %v1112
        %v1114 = vsub.f32 2.0, %v1113
        %v1115 = vmul.f32 %v1112, %v1114
        %v1116 = vmul.f32 %v1106, %v1115
        %v1117 = vmul.f32 %v1108, %v1115
        %v1118 = vmul.f32 %v610, %v1116
        %v1119 = vmul.f32 %v610, %v1117
        %1120 = vst [vmem:[%s568] sm:$0xff] %v1116
        %1121 = vst [vmem:[%s568 + $0x8] sm:$0xff] %v1117
        %1122 = vst [vmem:[%s575] sm:$0xff] %v1118
        %1123 = vst [vmem:[%s575 + $0x8] sm:$0xff] %v1119
        %1124 = vst [vmem:[%s582] sm:$0xff] %v1078
        %1125 = vst [vmem:[%s582 + $0x8] sm:$0xff] %v1098
        %1126 = vst [vmem:[%s589] sm:$0xff] %v945
        %1127 = vrot.lane.b32.xlu0 %v884, 32
        %v1128 = vpop.permute.xlu0 %1127
        %1131 = vrot.lane.b32.xlu0 %v915, 48
        %v1132 = vpop.permute.xlu0 %1131
        %1134 = vrot.lane.b32.xlu0 %v857, 26
        %v1135 = vpop.permute.xlu0 %1134
        %1138 = vrot.lane.b32.xlu0 %v861, 26
        %v1139 = vpop.permute.xlu0 %1138
        %v1141 = vsel %vm891, %v857, %v861
        %vm1142 = vcmask 261120
        %v1143 = vsel %vm1142, %v1141, %v1128
        %vm1144 = vcmask 392192
        %v1145 = vsel %vm1144, %v1143, %v1132
        %vm1146 = vcmask 474112
        %v1147 = vsel %vm1146, %v1145, %v1135
        %vm1148 = vcmask 482304
        %v1149 = vsel %vm1148, %v1147, %v1139
        %vm1150 = vcmask 490496
        %v1151 = vsel %vm1150, %v1149, %v612
        %vm1152 = vcmask 498688
        %v1153 = vsel %vm1152, %v1151, 0.0
        %1154 = vst [vmem:[%s596] sm:$0xff] %v1153
        %s1155 = sand.u32 %s309, 1
        %s1156 = scalar_lea.sflag [#allocation4], %s1155
        %s1157 = sand.u32 %s309, 1
        %s1158 = smul.addr %s1157, 16
        %s1159 = scalar_lea.vmem [#allocation7], %s1158
        %s1160 = sand.u32 %s39, 1
        %s1161 = scalar_lea.sflag [#allocation9], %s1160
        %s1162 = sand.u32 %s335, 1
        %s1163 = smul.addr %s1162, 16
        %s1164 = scalar_lea.vmem [#allocation8], %s1163
        %s1165 = sand.u32 %s39, 1
        %s1166 = scalar_lea.sflag [#allocation9], %s1165
        %s1167 = sand.u32 %s361, 1
        %s1168 = smul.addr %s1167, 16
        %s1169 = scalar_lea.vmem [#allocation10], %s1168
        %s1170 = sand.u32 %s39, 1
        %s1171 = scalar_lea.sflag [#allocation12], %s1170
        %s1172 = sand.u32 %s387, 1
        %s1173 = smul.addr %s1172, 8
        %s1174 = scalar_lea.vmem [#allocation11], %s1173
        %s1175 = sand.u32 %s39, 1
        %s1176 = scalar_lea.sflag [#allocation12], %s1175
        %s1177 = sand.u32 %s413, 1
        %s1178 = smul.addr %s1177, 8
        %s1179 = scalar_lea.vmem [#allocation13], %s1178
        // Predicated region
        $region77: #{tpu_custom_call.1} parent=67 // pred_check
          %p1180 = pneg %p319
        $region78: #{tpu_custom_call.1} parent=67 // pred_check_branch
          %1182 = sbr.rel (%p1180) target = $region80
        $region79: #{tpu_custom_call.1} parent=67 // pred_region
          %1184 = vsyncadd %s1156, 0
          %s1185 = smul.addr %s39, 2
          %s1186 = smul.addr %s1185, 8
          %s1187 = scalar_lea.hbm %s12, %s1186
          %s1189 = sshll.u32 %s1159, 4
          %s1190 = int_to_ptr.vmem [resolvable:$true] %s1189
          %s1191 = sshll.u32 %s1187, 4
          %s1192 = int_to_ptr.hbm [resolvable:$true] %s1191
          %1194 = dma.vmem_to_hbm [thread:$0]  %s1190, 256, %s1192, %s1156
        $region80: #{tpu_custom_call.1} parent=67 // pred_fallthru
          _
        // Predicated region
        $region81: #{tpu_custom_call.1} parent=67 // pred_check
          %p1195 = pneg %p345
        $region82: #{tpu_custom_call.1} parent=67 // pred_check_branch
          %1197 = sbr.rel (%p1195) target = $region84
        $region83: #{tpu_custom_call.1} parent=67 // pred_region
          %1199 = vsyncadd %s1161, 0
          %s1200 = smul.addr %s39, 2
          %s1201 = smul.addr %s1200, 8
          %s1202 = scalar_lea.hbm %s13, %s1201
          %s1204 = sshll.u32 %s1164, 4
          %s1205 = int_to_ptr.vmem [resolvable:$true] %s1204
          %s1206 = sshll.u32 %s1202, 4
          %s1207 = int_to_ptr.hbm [resolvable:$true] %s1206
          %1209 = dma.vmem_to_hbm [thread:$0]  %s1205, 256, %s1207, %s1161
        $region84: #{tpu_custom_call.1} parent=67 // pred_fallthru
          _
        // Predicated region
        $region85: #{tpu_custom_call.1} parent=67 // pred_check
          %p1210 = pneg %p371
        $region86: #{tpu_custom_call.1} parent=67 // pred_check_branch
          %1212 = sbr.rel (%p1210) target = $region88
        $region87: #{tpu_custom_call.1} parent=67 // pred_region
          %1214 = vsyncadd %s1166, 0
          %s1215 = smul.addr %s39, 2
          %s1216 = smul.addr %s1215, 8
          %s1217 = scalar_lea.hbm %s14, %s1216
          %s1219 = sshll.u32 %s1169, 4
          %s1220 = int_to_ptr.vmem [resolvable:$true] %s1219
          %s1221 = sshll.u32 %s1217, 4
          %s1222 = int_to_ptr.hbm [resolvable:$true] %s1221
          %1224 = dma.vmem_to_hbm [thread:$0]  %s1220, 256, %s1222, %s1166
        $region88: #{tpu_custom_call.1} parent=67 // pred_fallthru
          _
        // Predicated region
        $region89: #{tpu_custom_call.1} parent=67 // pred_check
          %p1225 = pneg %p397
        $region90: #{tpu_custom_call.1} parent=67 // pred_check_branch
          %1227 = sbr.rel (%p1225) target = $region92
        $region91: #{tpu_custom_call.1} parent=67 // pred_region
          %1229 = vsyncadd %s1171, 0
          %s1230 = smul.addr %s39, 8
          %s1231 = scalar_lea.hbm %s15, %s1230
          %s1233 = sshll.u32 %s1174, 4
          %s1234 = int_to_ptr.vmem [resolvable:$true] %s1233
          %s1235 = sshll.u32 %s1231, 4
          %s1236 = int_to_ptr.hbm [resolvable:$true] %s1235
          %1238 = dma.vmem_to_hbm [thread:$0]  %s1234, 128, %s1236, %s1171
        $region92: #{tpu_custom_call.1} parent=67 // pred_fallthru
          _
        // Predicated region
        $region93: #{tpu_custom_call.1} parent=67 // pred_check
          %p1239 = pneg %p423
        $region94: #{tpu_custom_call.1} parent=67 // pred_check_branch
          %1241 = sbr.rel (%p1239) target = $region96
        $region95: #{tpu_custom_call.1} parent=67 // pred_region
          %1243 = vsyncadd %s1176, 0
          %s1244 = smul.addr %s39, 8
          %s1245 = scalar_lea.hbm %s16, %s1244
          %s1247 = sshll.u32 %s1179, 4
          %s1248 = int_to_ptr.vmem [resolvable:$true] %s1247
          %s1249 = sshll.u32 %s1245, 4
          %s1250 = int_to_ptr.hbm [resolvable:$true] %s1249
          %1252 = dma.vmem_to_hbm [thread:$0]  %s1248, 128, %s1250, %s1176
        $region96: #{tpu_custom_call.1} parent=67 // pred_fallthru
          _
      $region68: #{tpu_custom_call.1} parent=5 // pred_fallthru
        _
      %p1253 = scmp.le.s32.totalorder 2, %s34
      // Predicated region
      $region97: #{tpu_custom_call.1} parent=5 // pred_check
        %p1254 = pneg %p1253
      $region98: #{tpu_custom_call.1} parent=5 // pred_check_branch
        %1256 = sbr.rel (%p1254) target = $region100
      $region99: #{tpu_custom_call.1} parent=5 // pred_region
        %s1257 = ssub.s32 %s34, 2
        // Predicated region
        $region101: #{tpu_custom_call.1} parent=99 // pred_check
          %p1258 = pneg %p325
        $region102: #{tpu_custom_call.1} parent=99 // pred_check_branch
          %1260 = sbr.rel (%p1258) target = $region104
        $region103: #{tpu_custom_call.1} parent=99 // pred_region
          %s1261 = sand.u32 %s310, 1
          %s1262 = scalar_lea.sflag [#allocation4], %s1261
          %s1263 = sand.u32 %s310, 1
          %s1264 = smul.addr %s1263, 16
          %s1265 = scalar_lea.vmem [#allocation7], %s1264
          %1267 = dma.done %s1262, 256
        $region104: #{tpu_custom_call.1} parent=99 // pred_fallthru
          _
        // Predicated region
        $region105: #{tpu_custom_call.1} parent=99 // pred_check
          %p1268 = pneg %p351
        $region106: #{tpu_custom_call.1} parent=99 // pred_check_branch
          %1270 = sbr.rel (%p1268) target = $region108
        $region107: #{tpu_custom_call.1} parent=99 // pred_region
          %s1271 = sand.u32 %s40, 1
          %s1272 = scalar_lea.sflag [#allocation9], %s1271
          %s1273 = sand.u32 %s336, 1
          %s1274 = smul.addr %s1273, 16
          %s1275 = scalar_lea.vmem [#allocation8], %s1274
          %1277 = dma.done %s1272, 256
        $region108: #{tpu_custom_call.1} parent=99 // pred_fallthru
          _
        // Predicated region
        $region109: #{tpu_custom_call.1} parent=99 // pred_check
          %p1278 = pneg %p377
        $region110: #{tpu_custom_call.1} parent=99 // pred_check_branch
          %1280 = sbr.rel (%p1278) target = $region112
        $region111: #{tpu_custom_call.1} parent=99 // pred_region
          %s1281 = sand.u32 %s40, 1
          %s1282 = scalar_lea.sflag [#allocation9], %s1281
          %s1283 = sand.u32 %s362, 1
          %s1284 = smul.addr %s1283, 16
          %s1285 = scalar_lea.vmem [#allocation10], %s1284
          %1287 = dma.done %s1282, 256
        $region112: #{tpu_custom_call.1} parent=99 // pred_fallthru
          _
        // Predicated region
        $region113: #{tpu_custom_call.1} parent=99 // pred_check
          %p1288 = pneg %p403
        $region114: #{tpu_custom_call.1} parent=99 // pred_check_branch
          %1290 = sbr.rel (%p1288) target = $region116
        $region115: #{tpu_custom_call.1} parent=99 // pred_region
          %s1291 = sand.u32 %s40, 1
          %s1292 = scalar_lea.sflag [#allocation12], %s1291
          %s1293 = sand.u32 %s388, 1
          %s1294 = smul.addr %s1293, 8
          %s1295 = scalar_lea.vmem [#allocation11], %s1294
          %1297 = dma.done %s1292, 128
        $region116: #{tpu_custom_call.1} parent=99 // pred_fallthru
          _
        // Predicated region
        $region117: #{tpu_custom_call.1} parent=99 // pred_check
          %p1298 = pneg %p429
        $region118: #{tpu_custom_call.1} parent=99 // pred_check_branch
          %1300 = sbr.rel (%p1298) target = $region120
        $region119: #{tpu_custom_call.1} parent=99 // pred_region
          %s1301 = sand.u32 %s40, 1
          %s1302 = scalar_lea.sflag [#allocation12], %s1301
          %s1303 = sand.u32 %s414, 1
          %s1304 = smul.addr %s1303, 8
          %s1305 = scalar_lea.vmem [#allocation13], %s1304
          %1307 = dma.done %s1302, 128
        $region120: #{tpu_custom_call.1} parent=99 // pred_fallthru
          _
      $region100: #{tpu_custom_call.1} parent=5 // pred_fallthru
        _
    $region6: #{tpu_custom_call.1} parent=1 // loop_footer
      %s38 = sadd.s32 1, %s34
    $region7: #{tpu_custom_call.1} parent=1 // loop_footer_branch
      %33 = sbr.rel target = $region3
    $region8: #{tpu_custom_call.1} parent=1 // loop_exit
      _
    %1308 = vsyncpa [#allocation3], 1
    %s1309 = scalar_lea.sflag [#allocation3], 1
    %1310 = vsyncpa %s1309, 1
    %1311 = vsyncpa [#allocation6], 1
    %1312 = vsyncpa [#allocation4], 1
    %s1313 = scalar_lea.sflag [#allocation4], 1
    %1314 = vsyncpa %s1313, 1
    %1315 = vsyncpa [#allocation9], 1
    %s1316 = scalar_lea.sflag [#allocation9], 1
    %1317 = vsyncpa %s1316, 1
    %1318 = vsyncpa [#allocation12], 1
    %s1319 = scalar_lea.sflag [#allocation12], 1
    %1320 = vsyncpa %s1319, 1

</llo_original>
